<compile_context>
chip_gen: v6e
topology: v6e:2x2x1
jax: 0.10.0
libtpu: 0.0.40
codegen_flags: <defaults>
</compile_context>

<pallas_src>
import functools

import jax
import jax.numpy as jnp
from jax.experimental import pallas as pl
from jax.experimental.pallas import tpu as pltpu


def _round_up(n, m):
    return (n + m - 1) // m * m


# --------------------------------------------------------------------------- #
# Kernel
# --------------------------------------------------------------------------- #
def block_kernel(x_ref, g1_ref, be1_ref, wqkv_ref, bqkv_ref, merge_ref,
                 g2_ref, be2_ref, w1_ref, bf1_ref, w2_ref, bf2_ref, o_ref,
                 *, head_dim, real_c):
    f32, bf16 = jnp.float32, jnp.bfloat16

    x = x_ref[0]                               # (T, Cp) f32, lanes >= real_c are zero
    T, Cp = x.shape
    H = wqkv_ref.shape[0]
    hdp = wqkv_ref.shape[2] // 3               # padded per-head slot width

    # ---- masked LayerNorm helper (statistics over the real C lanes only) ----
    lane = jax.lax.broadcasted_iota(jnp.int32, (T, Cp), 1)
    cmask = lane < real_c
    inv_c = 1.0 / real_c

    def layernorm(v, g, b):
        mu = jnp.sum(v, axis=-1, keepdims=True) * inv_c        # padded lanes are zero
        d = jnp.where(cmask, v - mu, 0.0)
        var = jnp.sum(d * d, axis=-1, keepdims=True) * inv_c
        return d * jax.lax.rsqrt(var + 1e-5) * g + b            # padded lanes stay zero

    # ---- norm1 ----
    xn = layernorm(x, g1_ref[0], be1_ref[0])

    # ---- QKV projection, batched over heads (canonical batched dot, bf16 MXU) ----
    xn_b = jnp.broadcast_to(xn.astype(bf16), (H, T, Cp))
    qkv = jnp.einsum("htc,hcd->htd", xn_b, wqkv_ref[...],
                     preferred_element_type=f32) + bqkv_ref[...]   # (H, T, 3*hdp)

    scale = 1.0 / (head_dim ** 0.5)            # fold scale into q once (O(T*C) mults)
    q = (qkv[..., :hdp] * scale).astype(bf16)
    k = qkv[..., hdp:2 * hdp].astype(bf16)
    v = qkv[..., 2 * hdp:].astype(bf16)

    # ---- causal softmax attention (all heads in one batched contraction) ----
    s = jnp.einsum("htd,hsd->hts", q, k, preferred_element_type=f32)   # (H, T, T)
    row = jax.lax.broadcasted_iota(jnp.int32, (T, T), 0)
    col = jax.lax.broadcasted_iota(jnp.int32, (T, T), 1)
    s = jnp.where((row >= col)[None, :, :], s, -1e30)
    m = jnp.max(s, axis=-1, keepdims=True)
    p = jnp.exp(s - m)
    p = p * pl.reciprocal(jnp.sum(p, axis=-1, keepdims=True), approx=True)

    att = jnp.einsum("hts,hsd->htd", p.astype(bf16), v,
                     preferred_element_type=f32)                       # (H, T, hdp)

    # ---- merge heads back into the channel layout via a constant 0/1 matrix ----
    att_m = jnp.einsum("htd,hdc->htc", att.astype(bf16), merge_ref[...],
                       preferred_element_type=f32).sum(axis=0)         # (T, Cp)

    # ---- residual 1 + norm2 + feed-forward ----
    y = att_m + x
    yn = layernorm(y, g2_ref[0], be2_ref[0]).astype(bf16)
    h1 = jnp.maximum(
        jnp.dot(yn, w1_ref[...], preferred_element_type=f32) + bf1_ref[0], 0.0)
    ff = jnp.dot(h1.astype(bf16), w2_ref[...],
                 preferred_element_type=f32) + bf2_ref[0]

    # output = feed_forward + x  (exactly as in Block.forward)
    o_ref[0] = ff + x


# --------------------------------------------------------------------------- #
# Wrapper: pad to lane-dense shapes, repack weights per head, call the kernel.
# --------------------------------------------------------------------------- #
def transformer_block(x, params, num_heads):
    B, T, C = x.shape
    F = params["w1"].shape[1]
    H = num_heads
    assert C % H == 0
    hd = C // H
    Cp = _round_up(max(C, 128), 128)
    Fp = _round_up(max(F, 128), 128)
    assert Cp % H == 0, "padded hidden dim must stay divisible by num_heads"
    hdp = Cp // H

    f32, bf16 = jnp.float32, jnp.bfloat16

    # ---- repack / zero-pad parameters (runs once, outside the kernel) ----
    wqkv, bqkv = params["wqkv"], params["bqkv"][0]
    wqkv_h = jnp.zeros((H, Cp, 3 * hdp), f32)
    bqkv_h = jnp.zeros((H, 1, 3 * hdp), f32)
    for h in range(H):
        for j in range(3):                                   # 0:q  1:k  2:v
            src = slice(j * C + h * hd, j * C + (h + 1) * hd)
            dst = slice(j * hdp, j * hdp + hd)
            wqkv_h = wqkv_h.at[h, :C, dst].set(wqkv[:, src])
            bqkv_h = bqkv_h.at[h, 0, dst].set(bqkv[src])

    # constant head-merge matrix: places head h, dim d at channel h*hd + d
    merge = jnp.zeros((H, hdp, Cp), f32)
    for h in range(H):
        merge = merge.at[h, :hd, h * hd:(h + 1) * hd].set(jnp.eye(hd, dtype=f32))

    def pad_vec(v, n):
        return jnp.zeros((1, n), f32).at[:, :v.shape[1]].set(v)

    g1, be1 = pad_vec(params["g1"], Cp), pad_vec(params["be1"], Cp)
    g2, be2 = pad_vec(params["g2"], Cp), pad_vec(params["be2"], Cp)
    bf1, bf2 = pad_vec(params["bf1"], Fp), pad_vec(params["bf2"], Cp)
    w1 = jnp.zeros((Cp, Fp), f32).at[:C, :F].set(params["w1"])
    w2 = jnp.zeros((Fp, Cp), f32).at[:F, :C].set(params["w2"])

    # bf16 operands for the MXU; biases / norm params stay f32.
    wqkv_h, merge = wqkv_h.astype(bf16), merge.astype(bf16)
    w1, w2 = w1.astype(bf16), w2.astype(bf16)

    x_p = jnp.zeros((B, T, Cp), f32).at[:, :, :C].set(x)

    kernel = functools.partial(block_kernel, head_dim=hd, real_c=C)

    def const_spec(shape):                                   # grid-invariant operand
        n = len(shape)
        return pl.BlockSpec(shape, lambda b, _n=n: (0,) * _n)

    in_specs = [
        pl.BlockSpec((1, T, Cp), lambda b: (b, 0, 0)),       # x
        const_spec((1, Cp)), const_spec((1, Cp)),            # norm1 gamma, beta
        const_spec((H, Cp, 3 * hdp)),                        # per-head QKV weights (bf16)
        const_spec((H, 1, 3 * hdp)),                         # per-head QKV bias (f32)
        const_spec((H, hdp, Cp)),                            # head-merge matrix (bf16)
        const_spec((1, Cp)), const_spec((1, Cp)),            # norm2 gamma, beta
        const_spec((Cp, Fp)), const_spec((1, Fp)),           # FFN W1, b1
        const_spec((Fp, Cp)), const_spec((1, Cp)),           # FFN W2, b2
    ]
    out_specs = pl.BlockSpec((1, T, Cp), lambda b: (b, 0, 0))

    operands = (x_p, g1, be1, wqkv_h, bqkv_h, merge, g2, be2, w1, bf1, w2, bf2)

    # VMEM budget from the actual per-step footprint (2x for double buffering)
    # plus headroom for intermediates.
    weight_bytes = sum(int(a.size) * a.dtype.itemsize for a in operands[1:])
    block_bytes = weight_bytes + 2 * T * Cp * 4              # + x block + out block
    vmem_limit = min(int(2 * block_bytes) + (8 << 20), 120 * 1024 * 1024)

    out = pl.pallas_call(
        kernel,
        out_shape=jax.ShapeDtypeStruct((B, T, Cp), f32),
        grid=(B,),
        in_specs=in_specs,
        out_specs=out_specs,
        compiler_params=pltpu.CompilerParams(
            dimension_semantics=("parallel",),
            vmem_limit_bytes=vmem_limit,
        ),
    )(*operands)
    return out[..., :C]


# --------------------------------------------------------------------------- #
# Pure-JAX reference of the PyTorch forward (eval mode, f32).
# --------------------------------------------------------------------------- #
def _layernorm_ref(x, gamma, beta, eps=1e-5):
    mu = jnp.mean(x, axis=-1, keepdims=True)
    var = jnp.mean((x - mu) ** 2, axis=-1, keepdims=True)
    return (x - mu) * jax.lax.rsqrt(var + eps) * gamma + beta


def block_reference(x, params, num_heads):
    B, T, C = x.shape
    hd = C // num_heads
    xn = _layernorm_ref(x, params["g1"][0], params["be1"][0])
    qkv = xn @ params["wqkv"] + params["bqkv"][0]
    q, k, v = qkv[..., :C], qkv[..., C:2 * C], qkv[..., 2 * C:]

    def split(t):  # (B, T, C) -> (B, H, T, hd)
        return t.reshape(B, T, num_heads, hd).transpose(0, 2, 1, 3)

    q, k, v = split(q), split(k), split(v)
    s = jnp.einsum("bhqd,bhkd->bhqk", q, k) / jnp.sqrt(jnp.float32(hd))
    mask = jnp.tril(jnp.ones((T, T), dtype=bool))
    s = jnp.where(mask, s, -jnp.inf)
    p = jax.nn.softmax(s, axis=-1)
    # NOTE: the PyTorch MultiHeadAttention defines self.projection but never
    # applies it in forward(); attention output is the merged heads directly.
    att = jnp.einsum("bhqk,bhkd->bhqd", p, v).transpose(0, 2, 1, 3).reshape(B, T, C)
    y = att + x
    yn = _layernorm_ref(y, params["g2"][0], params["be2"][0])
    ff = jnp.maximum(yn @ params["w1"] + params["bf1"][0], 0.0) @ params["w2"] \
        + params["bf2"][0]
    return ff + x


def init_params(key, hidden_dim, ff_dim):
    ks = jax.random.split(key, 6)
    scale = 0.02
    C, F = hidden_dim, ff_dim
    return {
        "g1": jnp.ones((1, C), jnp.float32),
        "be1": jnp.zeros((1, C), jnp.float32),
        "wqkv": scale * jax.random.normal(ks[0], (C, 3 * C), jnp.float32),
        "bqkv": scale * jax.random.normal(ks[1], (1, 3 * C), jnp.float32),
        "g2": jnp.ones((1, C), jnp.float32),
        "be2": jnp.zeros((1, C), jnp.float32),
        "w1": scale * jax.random.normal(ks[2], (C, F), jnp.float32),
        "bf1": scale * jax.random.normal(ks[3], (1, F), jnp.float32),
        "w2": scale * jax.random.normal(ks[4], (F, C), jnp.float32),
        "bf2": scale * jax.random.normal(ks[5], (1, C), jnp.float32),
    }


if __name__ == "__main__":
    # Block(num_heads=4, seq_length=8, hidden_dim=32, ff_dim=64, dropout=0.1)
    B, T, C, F, H = 2, 8, 32, 64, 4

    key = jax.random.PRNGKey(0)
    kx, kp = jax.random.split(key)
    x = jax.random.normal(kx, (B, T, C), jnp.float32)
    params = init_params(kp, C, F)

    out = transformer_block(x, params, num_heads=H)
    out = jax.block_until_ready(out)

    ref = block_reference(x, params, num_heads=H)
    assert out.shape == (B, T, C)
    # bf16 MXU operands + approx reciprocal -> relaxed tolerance vs f32 reference.
    assert jnp.allclose(out, ref, atol=2e-2, rtol=2e-2), \
        f"max abs err {jnp.max(jnp.abs(out - ref))}"

    print("KERNEL_OK")
</pallas_src>

<mosaic_0001>
module attributes {stable_mosaic.version = 11 : i64} {
  func.func @block_kernel(%arg0: i32, %arg1: memref<1x8x128xf32, #tpu.memory_space<vmem>>, %arg2: memref<1x128xf32, #tpu.memory_space<vmem>>, %arg3: memref<1x128xf32, #tpu.memory_space<vmem>>, %arg4: memref<4x128x96xbf16, #tpu.memory_space<vmem>>, %arg5: memref<4x1x96xf32, #tpu.memory_space<vmem>>, %arg6: memref<4x32x128xbf16, #tpu.memory_space<vmem>>, %arg7: memref<1x128xf32, #tpu.memory_space<vmem>>, %arg8: memref<1x128xf32, #tpu.memory_space<vmem>>, %arg9: memref<128x128xbf16, #tpu.memory_space<vmem>>, %arg10: memref<1x128xf32, #tpu.memory_space<vmem>>, %arg11: memref<128x128xbf16, #tpu.memory_space<vmem>>, %arg12: memref<1x128xf32, #tpu.memory_space<vmem>>, %arg13: memref<1x8x128xf32, #tpu.memory_space<vmem>>) attributes {dimension_semantics = [#tpu.dimension_semantics<parallel>], iteration_bounds = array<i64: 2>, scalar_prefetch = 0 : i64, scratch_operands = 0 : i64, tpu.core_type = #tpu.core_type<tc>, window_params = [{transform_indices = @transform_0, window_bounds = array<i64: 1, 8, 128>}, {pipeline_mode = #tpu.pipeline_mode<synchronous>, transform_indices = @transform_1, window_bounds = array<i64: 1, 128>}, {pipeline_mode = #tpu.pipeline_mode<synchronous>, transform_indices = @transform_2, window_bounds = array<i64: 1, 128>}, {pipeline_mode = #tpu.pipeline_mode<synchronous>, transform_indices = @transform_3, window_bounds = array<i64: 4, 128, 96>}, {pipeline_mode = #tpu.pipeline_mode<synchronous>, transform_indices = @transform_4, window_bounds = array<i64: 4, 1, 96>}, {pipeline_mode = #tpu.pipeline_mode<synchronous>, transform_indices = @transform_5, window_bounds = array<i64: 4, 32, 128>}, {pipeline_mode = #tpu.pipeline_mode<synchronous>, transform_indices = @transform_6, window_bounds = array<i64: 1, 128>}, {pipeline_mode = #tpu.pipeline_mode<synchronous>, transform_indices = @transform_7, window_bounds = array<i64: 1, 128>}, {pipeline_mode = #tpu.pipeline_mode<synchronous>, transform_indices = @transform_8, window_bounds = array<i64: 128, 128>}, {pipeline_mode = #tpu.pipeline_mode<synchronous>, transform_indices = @transform_9, window_bounds = array<i64: 1, 128>}, {pipeline_mode = #tpu.pipeline_mode<synchronous>, transform_indices = @transform_10, window_bounds = array<i64: 128, 128>}, {pipeline_mode = #tpu.pipeline_mode<synchronous>, transform_indices = @transform_11, window_bounds = array<i64: 1, 128>}, {transform_indices = @transform_12, window_bounds = array<i64: 1, 8, 128>}]} {
    %c0 = arith.constant 0 : index
    %c0_0 = arith.constant 0 : index
    %c0_1 = arith.constant 0 : index
    %0 = vector.load %arg1[%c0, %c0_0, %c0_1] : memref<1x8x128xf32, #tpu.memory_space<vmem>>, vector<1x8x128xf32>
    %1 = vector.shape_cast %0 : vector<1x8x128xf32> to vector<8x128xf32>
    %2 = tpu.iota {dimensions = array<i32: 1>} : vector<8x128xi32>
    %c32_i32 = arith.constant 32 : i32
    %3 = vector.broadcast %c32_i32 : i32 to vector<8x128xi32>
    %4 = arith.cmpi slt, %2, %3 : vector<8x128xi32>
    %c0_2 = arith.constant 0 : index
    %c0_3 = arith.constant 0 : index
    %5 = vector.load %arg2[%c0_2, %c0_3] : memref<1x128xf32, #tpu.memory_space<vmem>>, vector<1x128xf32>
    %6 = vector.shape_cast %5 : vector<1x128xf32> to vector<128xf32>
    %c0_4 = arith.constant 0 : index
    %c0_5 = arith.constant 0 : index
    %7 = vector.load %arg3[%c0_4, %c0_5] : memref<1x128xf32, #tpu.memory_space<vmem>>, vector<1x128xf32>
    %8 = vector.shape_cast %7 : vector<1x128xf32> to vector<128xf32>
    %cst = arith.constant dense<0.000000e+00> : vector<8xf32>
    %9 = vector.multi_reduction <add>, %1, %cst [1] : vector<8x128xf32> to vector<8xf32>
    %10 = vector.shape_cast %9 : vector<8xf32> to vector<8x1xf32>
    %cst_6 = arith.constant 3.125000e-02 : f32
    %11 = vector.broadcast %cst_6 : f32 to vector<8x1xf32>
    %12 = arith.mulf %10, %11 : vector<8x1xf32>
    %13 = vector.broadcast %12 : vector<8x1xf32> to vector<8x128xf32>
    %14 = arith.subf %1, %13 : vector<8x128xf32>
    %cst_7 = arith.constant 0.000000e+00 : f32
    %15 = vector.broadcast %cst_7 : f32 to vector<8x128xf32>
    %16 = arith.select %4, %14, %15 : vector<8x128xi1>, vector<8x128xf32>
    %17 = arith.mulf %16, %16 : vector<8x128xf32>
    %cst_8 = arith.constant dense<0.000000e+00> : vector<8xf32>
    %18 = vector.multi_reduction <add>, %17, %cst_8 [1] : vector<8x128xf32> to vector<8xf32>
    %19 = vector.shape_cast %18 : vector<8xf32> to vector<8x1xf32>
    %cst_9 = arith.constant 3.125000e-02 : f32
    %20 = vector.broadcast %cst_9 : f32 to vector<8x1xf32>
    %21 = arith.mulf %19, %20 : vector<8x1xf32>
    %cst_10 = arith.constant 9.99999974E-6 : f32
    %22 = vector.broadcast %cst_10 : f32 to vector<8x1xf32>
    %23 = arith.addf %21, %22 : vector<8x1xf32>
    %24 = math.rsqrt %23 : vector<8x1xf32>
    %25 = vector.broadcast %24 : vector<8x1xf32> to vector<8x128xf32>
    %26 = arith.mulf %16, %25 : vector<8x128xf32>
    %27 = vector.shape_cast %6 : vector<128xf32> to vector<1x128xf32>
    %28 = vector.broadcast %27 : vector<1x128xf32> to vector<8x128xf32>
    %29 = arith.mulf %26, %28 : vector<8x128xf32>
    %30 = vector.shape_cast %8 : vector<128xf32> to vector<1x128xf32>
    %31 = vector.broadcast %30 : vector<1x128xf32> to vector<8x128xf32>
    %32 = arith.addf %29, %31 : vector<8x128xf32>
    %33 = arith.truncf %32 : vector<8x128xf32> to vector<8x128xbf16>
    %34 = vector.shape_cast %33 : vector<8x128xbf16> to vector<1x8x128xbf16>
    %35 = vector.broadcast %34 : vector<1x8x128xbf16> to vector<4x8x128xbf16>
    %c0_11 = arith.constant 0 : index
    %c0_12 = arith.constant 0 : index
    %c0_13 = arith.constant 0 : index
    %36 = vector.load %arg4[%c0_11, %c0_12, %c0_13] : memref<4x128x96xbf16, #tpu.memory_space<vmem>>, vector<4x128x96xbf16>
    "tpu.trace_start"() <{level = 10 : i32, message = "htc,hcd->htd"}> : () -> ()
    %cst_14 = arith.constant dense<0.000000e+00> : vector<4x8x96xf32>
    %37 = tpu.matmul %35, %36, %cst_14 {dimension_numbers = #tpu.dot_dimension_numbers<[2], [1], [1], [2], [0, 0, 0, 1, 1, 2], [0], [0]>} : vector<4x8x128xbf16>, vector<4x128x96xbf16>, vector<4x8x96xf32> -> vector<4x8x96xf32>
    "tpu.trace_stop"() : () -> ()
    %c0_15 = arith.constant 0 : index
    %c0_16 = arith.constant 0 : index
    %c0_17 = arith.constant 0 : index
    %38 = vector.load %arg5[%c0_15, %c0_16, %c0_17] : memref<4x1x96xf32, #tpu.memory_space<vmem>>, vector<4x1x96xf32>
    %39 = vector.broadcast %38 : vector<4x1x96xf32> to vector<4x8x96xf32>
    %40 = arith.addf %37, %39 : vector<4x8x96xf32>
    %41 = vector.extract_strided_slice %40 {offsets = [0, 0, 0], sizes = [4, 8, 32], strides = [1, 1, 1]} : vector<4x8x96xf32> to vector<4x8x32xf32>
    %cst_18 = arith.constant 0.353553385 : f32
    %42 = vector.broadcast %cst_18 : f32 to vector<4x8x32xf32>
    %43 = arith.mulf %41, %42 : vector<4x8x32xf32>
    %44 = arith.truncf %43 : vector<4x8x32xf32> to vector<4x8x32xbf16>
    %45 = vector.extract_strided_slice %40 {offsets = [0, 0, 32], sizes = [4, 8, 32], strides = [1, 1, 1]} : vector<4x8x96xf32> to vector<4x8x32xf32>
    %46 = arith.truncf %45 : vector<4x8x32xf32> to vector<4x8x32xbf16>
    %47 = vector.extract_strided_slice %40 {offsets = [0, 0, 64], sizes = [4, 8, 32], strides = [1, 1, 1]} : vector<4x8x96xf32> to vector<4x8x32xf32>
    %48 = arith.truncf %47 : vector<4x8x32xf32> to vector<4x8x32xbf16>
    "tpu.trace_start"() <{level = 10 : i32, message = "htd,hsd->hts"}> : () -> ()
    %cst_19 = arith.constant dense<0.000000e+00> : vector<4x8x8xf32>
    %49 = tpu.matmul %44, %46, %cst_19 {dimension_numbers = #tpu.dot_dimension_numbers<[2], [2], [1], [1], [0, 0, 0, 1, 1, 1], [0], [0]>} : vector<4x8x32xbf16>, vector<4x8x32xbf16>, vector<4x8x8xf32> -> vector<4x8x8xf32>
    "tpu.trace_stop"() : () -> ()
    %50 = tpu.iota {dimensions = array<i32: 0>} : vector<8x8xi32>
    %51 = tpu.iota {dimensions = array<i32: 1>} : vector<8x8xi32>
    %52 = arith.cmpi sge, %50, %51 : vector<8x8xi32>
    %53 = vector.shape_cast %52 : vector<8x8xi1> to vector<1x8x8xi1>
    %cst_20 = arith.constant -1.000000e+30 : f32
    %54 = vector.shape_cast %53 : vector<1x8x8xi1> to vector<1x8x8xi1>
    %55 = vector.broadcast %54 : vector<1x8x8xi1> to vector<4x8x8xi1>
    %56 = vector.broadcast %cst_20 : f32 to vector<4x8x8xf32>
    %57 = arith.select %55, %49, %56 : vector<4x8x8xi1>, vector<4x8x8xf32>
    %cst_21 = arith.constant dense<0xFF800000> : vector<4x8xf32>
    %58 = vector.multi_reduction <maximumf>, %57, %cst_21 [2] : vector<4x8x8xf32> to vector<4x8xf32>
    %59 = vector.shape_cast %58 : vector<4x8xf32> to vector<4x8x1xf32>
    %60 = vector.broadcast %59 : vector<4x8x1xf32> to vector<4x8x8xf32>
    %61 = arith.subf %57, %60 : vector<4x8x8xf32>
    %62 = math.exp %61 : vector<4x8x8xf32>
    %cst_22 = arith.constant dense<0.000000e+00> : vector<4x8xf32>
    %63 = vector.multi_reduction <add>, %62, %cst_22 [2] : vector<4x8x8xf32> to vector<4x8xf32>
    %64 = vector.shape_cast %63 : vector<4x8xf32> to vector<4x8x1xf32>
    %65 = tpu.reciprocal %64 {approx = true} : vector<4x8x1xf32> -> vector<4x8x1xf32>
    %66 = vector.broadcast %65 : vector<4x8x1xf32> to vector<4x8x8xf32>
    %67 = arith.mulf %62, %66 : vector<4x8x8xf32>
    %68 = arith.truncf %67 : vector<4x8x8xf32> to vector<4x8x8xbf16>
    "tpu.trace_start"() <{level = 10 : i32, message = "hts,hsd->htd"}> : () -> ()
    %cst_23 = arith.constant dense<0.000000e+00> : vector<4x8x32xf32>
    %69 = tpu.matmul %68, %48, %cst_23 {dimension_numbers = #tpu.dot_dimension_numbers<[2], [1], [1], [2], [0, 0, 0, 1, 1, 2], [0], [0]>} : vector<4x8x8xbf16>, vector<4x8x32xbf16>, vector<4x8x32xf32> -> vector<4x8x32xf32>
    "tpu.trace_stop"() : () -> ()
    %70 = arith.truncf %69 : vector<4x8x32xf32> to vector<4x8x32xbf16>
    %c0_24 = arith.constant 0 : index
    %c0_25 = arith.constant 0 : index
    %c0_26 = arith.constant 0 : index
    %71 = vector.load %arg6[%c0_24, %c0_25, %c0_26] : memref<4x32x128xbf16, #tpu.memory_space<vmem>>, vector<4x32x128xbf16>
    "tpu.trace_start"() <{level = 10 : i32, message = "htd,hdc->htc"}> : () -> ()
    %cst_27 = arith.constant dense<0.000000e+00> : vector<4x8x128xf32>
    %72 = tpu.matmul %70, %71, %cst_27 {dimension_numbers = #tpu.dot_dimension_numbers<[2], [1], [1], [2], [0, 0, 0, 1, 1, 2], [0], [0]>} : vector<4x8x32xbf16>, vector<4x32x128xbf16>, vector<4x8x128xf32> -> vector<4x8x128xf32>
    "tpu.trace_stop"() : () -> ()
    %cst_28 = arith.constant dense<0.000000e+00> : vector<8x128xf32>
    %73 = vector.multi_reduction <add>, %72, %cst_28 [0] : vector<4x8x128xf32> to vector<8x128xf32>
    %74 = arith.addf %73, %1 : vector<8x128xf32>
    %c0_29 = arith.constant 0 : index
    %c0_30 = arith.constant 0 : index
    %75 = vector.load %arg7[%c0_29, %c0_30] : memref<1x128xf32, #tpu.memory_space<vmem>>, vector<1x128xf32>
    %76 = vector.shape_cast %75 : vector<1x128xf32> to vector<128xf32>
    %c0_31 = arith.constant 0 : index
    %c0_32 = arith.constant 0 : index
    %77 = vector.load %arg8[%c0_31, %c0_32] : memref<1x128xf32, #tpu.memory_space<vmem>>, vector<1x128xf32>
    %78 = vector.shape_cast %77 : vector<1x128xf32> to vector<128xf32>
    %cst_33 = arith.constant dense<0.000000e+00> : vector<8xf32>
    %79 = vector.multi_reduction <add>, %74, %cst_33 [1] : vector<8x128xf32> to vector<8xf32>
    %80 = vector.shape_cast %79 : vector<8xf32> to vector<8x1xf32>
    %cst_34 = arith.constant 3.125000e-02 : f32
    %81 = vector.broadcast %cst_34 : f32 to vector<8x1xf32>
    %82 = arith.mulf %80, %81 : vector<8x1xf32>
    %83 = vector.broadcast %82 : vector<8x1xf32> to vector<8x128xf32>
    %84 = arith.subf %74, %83 : vector<8x128xf32>
    %cst_35 = arith.constant 0.000000e+00 : f32
    %85 = vector.broadcast %cst_35 : f32 to vector<8x128xf32>
    %86 = arith.select %4, %84, %85 : vector<8x128xi1>, vector<8x128xf32>
    %87 = arith.mulf %86, %86 : vector<8x128xf32>
    %cst_36 = arith.constant dense<0.000000e+00> : vector<8xf32>
    %88 = vector.multi_reduction <add>, %87, %cst_36 [1] : vector<8x128xf32> to vector<8xf32>
    %89 = vector.shape_cast %88 : vector<8xf32> to vector<8x1xf32>
    %cst_37 = arith.constant 3.125000e-02 : f32
    %90 = vector.broadcast %cst_37 : f32 to vector<8x1xf32>
    %91 = arith.mulf %89, %90 : vector<8x1xf32>
    %cst_38 = arith.constant 9.99999974E-6 : f32
    %92 = vector.broadcast %cst_38 : f32 to vector<8x1xf32>
    %93 = arith.addf %91, %92 : vector<8x1xf32>
    %94 = math.rsqrt %93 : vector<8x1xf32>
    %95 = vector.broadcast %94 : vector<8x1xf32> to vector<8x128xf32>
    %96 = arith.mulf %86, %95 : vector<8x128xf32>
    %97 = vector.shape_cast %76 : vector<128xf32> to vector<1x128xf32>
    %98 = vector.broadcast %97 : vector<1x128xf32> to vector<8x128xf32>
    %99 = arith.mulf %96, %98 : vector<8x128xf32>
    %100 = vector.shape_cast %78 : vector<128xf32> to vector<1x128xf32>
    %101 = vector.broadcast %100 : vector<1x128xf32> to vector<8x128xf32>
    %102 = arith.addf %99, %101 : vector<8x128xf32>
    %103 = arith.truncf %102 : vector<8x128xf32> to vector<8x128xbf16>
    %c0_39 = arith.constant 0 : index
    %c0_40 = arith.constant 0 : index
    %104 = vector.load %arg9[%c0_39, %c0_40] : memref<128x128xbf16, #tpu.memory_space<vmem>>, vector<128x128xbf16>
    %cst_41 = arith.constant dense<0.000000e+00> : vector<8x128xf32>
    %105 = tpu.matmul %103, %104, %cst_41 {dimension_numbers = #tpu.dot_dimension_numbers<[1], [0], [0], [1], [0, 0, 1, 1], [], []>} : vector<8x128xbf16>, vector<128x128xbf16>, vector<8x128xf32> -> vector<8x128xf32>
    %c0_42 = arith.constant 0 : index
    %c0_43 = arith.constant 0 : index
    %106 = vector.load %arg10[%c0_42, %c0_43] : memref<1x128xf32, #tpu.memory_space<vmem>>, vector<1x128xf32>
    %107 = vector.shape_cast %106 : vector<1x128xf32> to vector<128xf32>
    %108 = vector.shape_cast %107 : vector<128xf32> to vector<1x128xf32>
    %109 = vector.broadcast %108 : vector<1x128xf32> to vector<8x128xf32>
    %110 = arith.addf %105, %109 : vector<8x128xf32>
    %cst_44 = arith.constant 0.000000e+00 : f32
    %111 = vector.broadcast %cst_44 : f32 to vector<8x128xf32>
    %112 = arith.maximumf %110, %111 : vector<8x128xf32>
    %113 = arith.truncf %112 : vector<8x128xf32> to vector<8x128xbf16>
    %c0_45 = arith.constant 0 : index
    %c0_46 = arith.constant 0 : index
    %114 = vector.load %arg11[%c0_45, %c0_46] : memref<128x128xbf16, #tpu.memory_space<vmem>>, vector<128x128xbf16>
    %cst_47 = arith.constant dense<0.000000e+00> : vector<8x128xf32>
    %115 = tpu.matmul %113, %114, %cst_47 {dimension_numbers = #tpu.dot_dimension_numbers<[1], [0], [0], [1], [0, 0, 1, 1], [], []>} : vector<8x128xbf16>, vector<128x128xbf16>, vector<8x128xf32> -> vector<8x128xf32>
    %c0_48 = arith.constant 0 : index
    %c0_49 = arith.constant 0 : index
    %116 = vector.load %arg12[%c0_48, %c0_49] : memref<1x128xf32, #tpu.memory_space<vmem>>, vector<1x128xf32>
    %117 = vector.shape_cast %116 : vector<1x128xf32> to vector<128xf32>
    %118 = vector.shape_cast %117 : vector<128xf32> to vector<1x128xf32>
    %119 = vector.broadcast %118 : vector<1x128xf32> to vector<8x128xf32>
    %120 = arith.addf %115, %119 : vector<8x128xf32>
    %121 = arith.addf %120, %1 : vector<8x128xf32>
    %c0_50 = arith.constant 0 : index
    %c0_51 = arith.constant 0 : index
    %c0_52 = arith.constant 0 : index
    %122 = vector.load %arg13[%c0_50, %c0_51, %c0_52] : memref<1x8x128xf32, #tpu.memory_space<vmem>>, vector<1x8x128xf32>
    %123 = vector.shape_cast %122 : vector<1x8x128xf32> to vector<8x128xf32>
    %124 = vector.shape_cast %121 : vector<8x128xf32> to vector<1x8x128xf32>
    tpu.vector_store %arg13[%c0_50, %c0_51, %c0_52], %124 {strides = array<i32>} : memref<1x8x128xf32, #tpu.memory_space<vmem>>, vector<1x8x128xf32>,
    return
  }
  func.func @transform_0(%arg0: i32) -> (i32, i32, i32) {
    %c0_i32 = arith.constant 0 : i32
    %c0_i32_0 = arith.constant 0 : i32
    %c0_i32_1 = arith.constant 0 : i32
    return %arg0, %c0_i32, %c0_i32_0 : i32, i32, i32
  }
  func.func @transform_1(%arg0: i32) -> (i32, i32) {
    %c0_i32 = arith.constant 0 : i32
    %c0_i32_0 = arith.constant 0 : i32
    %c0_i32_1 = arith.constant 0 : i32
    return %c0_i32, %c0_i32_0 : i32, i32
  }
  func.func @transform_2(%arg0: i32) -> (i32, i32) {
    %c0_i32 = arith.constant 0 : i32
    %c0_i32_0 = arith.constant 0 : i32
    %c0_i32_1 = arith.constant 0 : i32
    return %c0_i32, %c0_i32_0 : i32, i32
  }
  func.func @transform_3(%arg0: i32) -> (i32, i32, i32) {
    %c0_i32 = arith.constant 0 : i32
    %c0_i32_0 = arith.constant 0 : i32
    %c0_i32_1 = arith.constant 0 : i32
    %c0_i32_2 = arith.constant 0 : i32
    return %c0_i32, %c0_i32_0, %c0_i32_1 : i32, i32, i32
  }
  func.func @transform_4(%arg0: i32) -> (i32, i32, i32) {
    %c0_i32 = arith.constant 0 : i32
    %c0_i32_0 = arith.constant 0 : i32
    %c0_i32_1 = arith.constant 0 : i32
    %c0_i32_2 = arith.constant 0 : i32
    return %c0_i32, %c0_i32_0, %c0_i32_1 : i32, i32, i32
  }
  func.func @transform_5(%arg0: i32) -> (i32, i32, i32) {
    %c0_i32 = arith.constant 0 : i32
    %c0_i32_0 = arith.constant 0 : i32
    %c0_i32_1 = arith.constant 0 : i32
    %c0_i32_2 = arith.constant 0 : i32
    return %c0_i32, %c0_i32_0, %c0_i32_1 : i32, i32, i32
  }
  func.func @transform_6(%arg0: i32) -> (i32, i32) {
    %c0_i32 = arith.constant 0 : i32
    %c0_i32_0 = arith.constant 0 : i32
    %c0_i32_1 = arith.constant 0 : i32
    return %c0_i32, %c0_i32_0 : i32, i32
  }
  func.func @transform_7(%arg0: i32) -> (i32, i32) {
    %c0_i32 = arith.constant 0 : i32
    %c0_i32_0 = arith.constant 0 : i32
    %c0_i32_1 = arith.constant 0 : i32
    return %c0_i32, %c0_i32_0 : i32, i32
  }
  func.func @transform_8(%arg0: i32) -> (i32, i32) {
    %c0_i32 = arith.constant 0 : i32
    %c0_i32_0 = arith.constant 0 : i32
    %c0_i32_1 = arith.constant 0 : i32
    return %c0_i32, %c0_i32_0 : i32, i32
  }
  func.func @transform_9(%arg0: i32) -> (i32, i32) {
    %c0_i32 = arith.constant 0 : i32
    %c0_i32_0 = arith.constant 0 : i32
    %c0_i32_1 = arith.constant 0 : i32
    return %c0_i32, %c0_i32_0 : i32, i32
  }
  func.func @transform_10(%arg0: i32) -> (i32, i32) {
    %c0_i32 = arith.constant 0 : i32
    %c0_i32_0 = arith.constant 0 : i32
    %c0_i32_1 = arith.constant 0 : i32
    return %c0_i32, %c0_i32_0 : i32, i32
  }
  func.func @transform_11(%arg0: i32) -> (i32, i32) {
    %c0_i32 = arith.constant 0 : i32
    %c0_i32_0 = arith.constant 0 : i32
    %c0_i32_1 = arith.constant 0 : i32
    return %c0_i32, %c0_i32_0 : i32, i32
  }
  func.func @transform_12(%arg0: i32) -> (i32, i32, i32) {
    %c0_i32 = arith.constant 0 : i32
    %c0_i32_0 = arith.constant 0 : i32
    %c0_i32_1 = arith.constant 0 : i32
    return %arg0, %c0_i32, %c0_i32_0 : i32, i32, i32
  }
}

</mosaic_0001>

<llo_original>
// kernel: tpu_custom_call.1
$region0: #{tpu_custom_call.1}
  #allocation0 [shape = 'u32[]', space=smem, size = 0x4, offset = 0x4, fixed_abs, tag = 'smem constant byte address 0x4 - core index']
  #allocation1 [shape = 'u32[144,128]{1,0:T(1,128)}', space=vmem, size = 0x12000, scoped, tag = 'internal scratch']
  %s0 = inlined_call_operand.vmem [shape: f32[2,8,128], index: 0, kind: input, shape index: {}]
  %s1 = inlined_call_operand.vmem [shape: f32[1,128], index: 1, kind: input, shape index: {}]
  %s2 = inlined_call_operand.vmem [shape: f32[1,128], index: 2, kind: input, shape index: {}]
  %s3 = inlined_call_operand.vmem [shape: bf16[4,128,96], index: 3, kind: input, shape index: {}]
  %s4 = inlined_call_operand.vmem [shape: f32[4,1,96], index: 4, kind: input, shape index: {}]
  %s5 = inlined_call_operand.vmem [shape: bf16[4,32,128], index: 5, kind: input, shape index: {}]
  %s6 = inlined_call_operand.vmem [shape: f32[1,128], index: 6, kind: input, shape index: {}]
  %s7 = inlined_call_operand.vmem [shape: f32[1,128], index: 7, kind: input, shape index: {}]
  %s8 = inlined_call_operand.vmem [shape: bf16[128,128], index: 8, kind: input, shape index: {}]
  %s9 = inlined_call_operand.vmem [shape: f32[1,128], index: 9, kind: input, shape index: {}]
  %s10 = inlined_call_operand.vmem [shape: bf16[128,128], index: 10, kind: input, shape index: {}]
  %s11 = inlined_call_operand.vmem [shape: f32[1,128], index: 11, kind: input, shape index: {}]
  %s12 = inlined_call_operand.hbm [shape: f32[2,8,128], index: 12, kind: output, shape index: {}]
  %s13 = sld [smem:[#allocation0]]
  $region81: #{tpu_custom_call.1} parent=0
    _
  %s15 = ssub.s32 1, %s13
  %s16 = scalar_select 0, %s15, %s13
  $region1: #{tpu_custom_call.1} parent=0
    #allocation2 [shape = 'u8[8192]{0}', space=vmem, size = 0x2000, scoped, tag = 'output window, operand 0']
    #allocation3 [shape = 's32[2]{0}', space=sflag, size = 0x8, scoped, tag = 'scoped memory for tpu_custom_call.1']
    %17 = vsyncpa [#allocation3], 0
    %s18 = scalar_lea.sflag [#allocation3], 1
    %19 = vsyncpa %s18, 0
    loop: start=0, step=1, limit=4
    $region2: #{tpu_custom_call.1} parent=1 // loop_pre_header
      _
    $region3: #{tpu_custom_call.1} parent=1 // loop_header
      %s21 = sphi 0, %s25
      %p22 = scmp.ge.s32.totalorder %s21, 4
      %s31 = sphi 0, %s33
      %s34 = sphi 0, %s31
      %s35 = sphi 0, %s34
      %s51 = sphi 0, %s35
      %s55 = sphi 0, %s55
      %s57 = sphi 0, %s55
      %s58 = sphi 0, %s57
      %s72 = sphi 0, %s58
      %s76 = sphi 0, %s76
      %s78 = sphi 0, %s76
      %s79 = sphi 0, %s78
      %s93 = sphi 0, %s79
      %s97 = sphi 0, %s97
      %s99 = sphi 0, %s97
      %s100 = sphi 0, %s99
      %s114 = sphi 0, %s100
      %s118 = sphi 0, %s118
      %s120 = sphi 0, %s118
      %s121 = sphi 0, %s120
      %s135 = sphi 0, %s121
      %s139 = sphi 0, %s139
      %s141 = sphi 0, %s139
      %s142 = sphi 0, %s141
      %s156 = sphi 0, %s142
      %s160 = sphi 0, %s160
      %s162 = sphi 0, %s160
      %s163 = sphi 0, %s162
      %s177 = sphi 0, %s163
      %s181 = sphi 0, %s181
      %s183 = sphi 0, %s181
      %s184 = sphi 0, %s183
      %s198 = sphi 0, %s184
      %s202 = sphi 0, %s202
      %s204 = sphi 0, %s202
      %s205 = sphi 0, %s204
      %s219 = sphi 0, %s205
      %s223 = sphi 0, %s223
      %s225 = sphi 0, %s223
      %s226 = sphi 0, %s225
      %s240 = sphi 0, %s226
      %s244 = sphi 0, %s244
      %s246 = sphi 0, %s244
      %s247 = sphi 0, %s246
      %s261 = sphi 0, %s247
      %s265 = sphi 0, %s265
      %s267 = sphi 0, %s265
      %s268 = sphi 0, %s267
      %s282 = sphi 0, %s268
      %s288 = sphi 0, %s290
      %s291 = sphi 0, %s288
      %s292 = sphi 0, %s291
      %s308 = sphi 0, %s292
    $region4: #{tpu_custom_call.1} parent=1 // loop_header_branch
      %24 = sbr.rel (%p22) target = $region8
    $region5: #{tpu_custom_call.1} parent=1 // loop_body
      %s26 = ssub.s32 %s21, 1
      %s27 = ssub.s32 %s21, 2
      %s28 = sadd.s32 %s21, 1
      %s29 = ssub.s32 %s21, %s28
      %p30 = scmp.eq.s32.totalorder %s29, 0
      %s32 = sadd.s32 %s31, 1
      %s33 = scalar_select %p30, %s31, %s32
      %p36 = pneg %p30
      %p37 = scmp.eq.s32.totalorder %s21, 1
      %p38 = por %p36, %p37
      %p39 = scmp.ne.s32.totalorder %s31, %s34
      %p40 = scmp.eq.s32.totalorder %s21, 0
      %p41 = por %p39, %p40
      %p42 = scmp.ne.s32.totalorder %s31, %s34
      %p43 = scmp.eq.s32.totalorder %s26, 1
      %p44 = por %p42, %p43
      %p45 = scmp.ne.s32.totalorder %s34, %s35
      %p46 = scmp.eq.s32.totalorder %s26, 0
      %p47 = por %p45, %p46
      %p48 = scmp.ne.s32.totalorder %s34, %s35
      %p49 = scmp.eq.s32.totalorder %s27, 1
      %p50 = por %p48, %p49
      %p52 = scmp.ne.s32.totalorder %s35, %s51
      %p53 = scmp.eq.s32.totalorder %s27, 0
      %p54 = por %p52, %p53
      %s56 = sadd.s32 %s55, 1
      %p59 = scmp.eq.s32.totalorder %s21, 1
      %p60 = scmp.ne.s32.totalorder %s55, %s57
      %p61 = scmp.eq.s32.totalorder %s21, 0
      %p62 = por %p60, %p61
      %p63 = scmp.ne.s32.totalorder %s55, %s57
      %p64 = scmp.eq.s32.totalorder %s26, 1
      %p65 = por %p63, %p64
      %p66 = scmp.ne.s32.totalorder %s57, %s58
      %p67 = scmp.eq.s32.totalorder %s26, 0
      %p68 = por %p66, %p67
      %p69 = scmp.ne.s32.totalorder %s57, %s58
      %p70 = scmp.eq.s32.totalorder %s27, 1
      %p71 = por %p69, %p70
      %p73 = scmp.ne.s32.totalorder %s58, %s72
      %p74 = scmp.eq.s32.totalorder %s27, 0
      %p75 = por %p73, %p74
      %s77 = sadd.s32 %s76, 1
      %p80 = scmp.eq.s32.totalorder %s21, 1
      %p81 = scmp.ne.s32.totalorder %s76, %s78
      %p82 = scmp.eq.s32.totalorder %s21, 0
      %p83 = por %p81, %p82
      %p84 = scmp.ne.s32.totalorder %s76, %s78
      %p85 = scmp.eq.s32.totalorder %s26, 1
      %p86 = por %p84, %p85
      %p87 = scmp.ne.s32.totalorder %s78, %s79
      %p88 = scmp.eq.s32.totalorder %s26, 0
      %p89 = por %p87, %p88
      %p90 = scmp.ne.s32.totalorder %s78, %s79
      %p91 = scmp.eq.s32.totalorder %s27, 1
      %p92 = por %p90, %p91
      %p94 = scmp.ne.s32.totalorder %s79, %s93
      %p95 = scmp.eq.s32.totalorder %s27, 0
      %p96 = por %p94, %p95
      %s98 = sadd.s32 %s97, 1
      %p101 = scmp.eq.s32.totalorder %s21, 1
      %p102 = scmp.ne.s32.totalorder %s97, %s99
      %p103 = scmp.eq.s32.totalorder %s21, 0
      %p104 = por %p102, %p103
      %p105 = scmp.ne.s32.totalorder %s97, %s99
      %p106 = scmp.eq.s32.totalorder %s26, 1
      %p107 = por %p105, %p106
      %p108 = scmp.ne.s32.totalorder %s99, %s100
      %p109 = scmp.eq.s32.totalorder %s26, 0
      %p110 = por %p108, %p109
      %p111 = scmp.ne.s32.totalorder %s99, %s100
      %p112 = scmp.eq.s32.totalorder %s27, 1
      %p113 = por %p111, %p112
      %p115 = scmp.ne.s32.totalorder %s100, %s114
      %p116 = scmp.eq.s32.totalorder %s27, 0
      %p117 = por %p115, %p116
      %s119 = sadd.s32 %s118, 1
      %p122 = scmp.eq.s32.totalorder %s21, 1
      %p123 = scmp.ne.s32.totalorder %s118, %s120
      %p124 = scmp.eq.s32.totalorder %s21, 0
      %p125 = por %p123, %p124
      %p126 = scmp.ne.s32.totalorder %s118, %s120
      %p127 = scmp.eq.s32.totalorder %s26, 1
      %p128 = por %p126, %p127
      %p129 = scmp.ne.s32.totalorder %s120, %s121
      %p130 = scmp.eq.s32.totalorder %s26, 0
      %p131 = por %p129, %p130
      %p132 = scmp.ne.s32.totalorder %s120, %s121
      %p133 = scmp.eq.s32.totalorder %s27, 1
      %p134 = por %p132, %p133
      %p136 = scmp.ne.s32.totalorder %s121, %s135
      %p137 = scmp.eq.s32.totalorder %s27, 0
      %p138 = por %p136, %p137
      %s140 = sadd.s32 %s139, 1
      %p143 = scmp.eq.s32.totalorder %s21, 1
      %p144 = scmp.ne.s32.totalorder %s139, %s141
      %p145 = scmp.eq.s32.totalorder %s21, 0
      %p146 = por %p144, %p145
      %p147 = scmp.ne.s32.totalorder %s139, %s141
      %p148 = scmp.eq.s32.totalorder %s26, 1
      %p149 = por %p147, %p148
      %p150 = scmp.ne.s32.totalorder %s141, %s142
      %p151 = scmp.eq.s32.totalorder %s26, 0
      %p152 = por %p150, %p151
      %p153 = scmp.ne.s32.totalorder %s141, %s142
      %p154 = scmp.eq.s32.totalorder %s27, 1
      %p155 = por %p153, %p154
      %p157 = scmp.ne.s32.totalorder %s142, %s156
      %p158 = scmp.eq.s32.totalorder %s27, 0
      %p159 = por %p157, %p158
      %s161 = sadd.s32 %s160, 1
      %p164 = scmp.eq.s32.totalorder %s21, 1
      %p165 = scmp.ne.s32.totalorder %s160, %s162
      %p166 = scmp.eq.s32.totalorder %s21, 0
      %p167 = por %p165, %p166
      %p168 = scmp.ne.s32.totalorder %s160, %s162
      %p169 = scmp.eq.s32.totalorder %s26, 1
      %p170 = por %p168, %p169
      %p171 = scmp.ne.s32.totalorder %s162, %s163
      %p172 = scmp.eq.s32.totalorder %s26, 0
      %p173 = por %p171, %p172
      %p174 = scmp.ne.s32.totalorder %s162, %s163
      %p175 = scmp.eq.s32.totalorder %s27, 1
      %p176 = por %p174, %p175
      %p178 = scmp.ne.s32.totalorder %s163, %s177
      %p179 = scmp.eq.s32.totalorder %s27, 0
      %p180 = por %p178, %p179
      %s182 = sadd.s32 %s181, 1
      %p185 = scmp.eq.s32.totalorder %s21, 1
      %p186 = scmp.ne.s32.totalorder %s181, %s183
      %p187 = scmp.eq.s32.totalorder %s21, 0
      %p188 = por %p186, %p187
      %p189 = scmp.ne.s32.totalorder %s181, %s183
      %p190 = scmp.eq.s32.totalorder %s26, 1
      %p191 = por %p189, %p190
      %p192 = scmp.ne.s32.totalorder %s183, %s184
      %p193 = scmp.eq.s32.totalorder %s26, 0
      %p194 = por %p192, %p193
      %p195 = scmp.ne.s32.totalorder %s183, %s184
      %p196 = scmp.eq.s32.totalorder %s27, 1
      %p197 = por %p195, %p196
      %p199 = scmp.ne.s32.totalorder %s184, %s198
      %p200 = scmp.eq.s32.totalorder %s27, 0
      %p201 = por %p199, %p200
      %s203 = sadd.s32 %s202, 1
      %p206 = scmp.eq.s32.totalorder %s21, 1
      %p207 = scmp.ne.s32.totalorder %s202, %s204
      %p208 = scmp.eq.s32.totalorder %s21, 0
      %p209 = por %p207, %p208
      %p210 = scmp.ne.s32.totalorder %s202, %s204
      %p211 = scmp.eq.s32.totalorder %s26, 1
      %p212 = por %p210, %p211
      %p213 = scmp.ne.s32.totalorder %s204, %s205
      %p214 = scmp.eq.s32.totalorder %s26, 0
      %p215 = por %p213, %p214
      %p216 = scmp.ne.s32.totalorder %s204, %s205
      %p217 = scmp.eq.s32.totalorder %s27, 1
      %p218 = por %p216, %p217
      %p220 = scmp.ne.s32.totalorder %s205, %s219
      %p221 = scmp.eq.s32.totalorder %s27, 0
      %p222 = por %p220, %p221
      %s224 = sadd.s32 %s223, 1
      %p227 = scmp.eq.s32.totalorder %s21, 1
      %p228 = scmp.ne.s32.totalorder %s223, %s225
      %p229 = scmp.eq.s32.totalorder %s21, 0
      %p230 = por %p228, %p229
      %p231 = scmp.ne.s32.totalorder %s223, %s225
      %p232 = scmp.eq.s32.totalorder %s26, 1
      %p233 = por %p231, %p232
      %p234 = scmp.ne.s32.totalorder %s225, %s226
      %p235 = scmp.eq.s32.totalorder %s26, 0
      %p236 = por %p234, %p235
      %p237 = scmp.ne.s32.totalorder %s225, %s226
      %p238 = scmp.eq.s32.totalorder %s27, 1
      %p239 = por %p237, %p238
      %p241 = scmp.ne.s32.totalorder %s226, %s240
      %p242 = scmp.eq.s32.totalorder %s27, 0
      %p243 = por %p241, %p242
      %s245 = sadd.s32 %s244, 1
      %p248 = scmp.eq.s32.totalorder %s21, 1
      %p249 = scmp.ne.s32.totalorder %s244, %s246
      %p250 = scmp.eq.s32.totalorder %s21, 0
      %p251 = por %p249, %p250
      %p252 = scmp.ne.s32.totalorder %s244, %s246
      %p253 = scmp.eq.s32.totalorder %s26, 1
      %p254 = por %p252, %p253
      %p255 = scmp.ne.s32.totalorder %s246, %s247
      %p256 = scmp.eq.s32.totalorder %s26, 0
      %p257 = por %p255, %p256
      %p258 = scmp.ne.s32.totalorder %s246, %s247
      %p259 = scmp.eq.s32.totalorder %s27, 1
      %p260 = por %p258, %p259
      %p262 = scmp.ne.s32.totalorder %s247, %s261
      %p263 = scmp.eq.s32.totalorder %s27, 0
      %p264 = por %p262, %p263
      %s266 = sadd.s32 %s265, 1
      %p269 = scmp.eq.s32.totalorder %s21, 1
      %p270 = scmp.ne.s32.totalorder %s265, %s267
      %p271 = scmp.eq.s32.totalorder %s21, 0
      %p272 = por %p270, %p271
      %p273 = scmp.ne.s32.totalorder %s265, %s267
      %p274 = scmp.eq.s32.totalorder %s26, 1
      %p275 = por %p273, %p274
      %p276 = scmp.ne.s32.totalorder %s267, %s268
      %p277 = scmp.eq.s32.totalorder %s26, 0
      %p278 = por %p276, %p277
      %p279 = scmp.ne.s32.totalorder %s267, %s268
      %p280 = scmp.eq.s32.totalorder %s27, 1
      %p281 = por %p279, %p280
      %p283 = scmp.ne.s32.totalorder %s268, %s282
      %p284 = scmp.eq.s32.totalorder %s27, 0
      %p285 = por %p283, %p284
      %s286 = ssub.s32 %s21, %s28
      %p287 = scmp.eq.s32.totalorder %s286, 0
      %s289 = sadd.s32 %s288, 1
      %s290 = scalar_select %p287, %s288, %s289
      %p293 = pneg %p287
      %p294 = scmp.eq.s32.totalorder %s21, 1
      %p295 = por %p293, %p294
      %p296 = scmp.ne.s32.totalorder %s288, %s291
      %p297 = scmp.eq.s32.totalorder %s21, 0
      %p298 = por %p296, %p297
      %p299 = scmp.ne.s32.totalorder %s288, %s291
      %p300 = scmp.eq.s32.totalorder %s26, 1
      %p301 = por %p299, %p300
      %p302 = scmp.ne.s32.totalorder %s291, %s292
      %p303 = scmp.eq.s32.totalorder %s26, 0
      %p304 = por %p302, %p303
      %p305 = scmp.ne.s32.totalorder %s291, %s292
      %p306 = scmp.eq.s32.totalorder %s27, 1
      %p307 = por %p305, %p306
      %p309 = scmp.ne.s32.totalorder %s292, %s308
      %p310 = scmp.eq.s32.totalorder %s27, 0
      %p311 = por %p309, %p310
      %p312 = scmp.le.s32.totalorder 1, %s21
      %p313 = scmp.lt.s32.totalorder %s21, 3
      %p314 = pnand %p312, %p313
      %p315 = pneg %p314
      // Predicated region
      $region9: #{tpu_custom_call.1} parent=5 // pred_check
        _
      $region10: #{tpu_custom_call.1} parent=5 // pred_check_branch
        %317 = sbr.rel (%p314) target = $region12
      $region11: #{tpu_custom_call.1} parent=5 // pred_region
        %s318 = ssub.s32 %s21, 1
        // Predicated region
        $region13: #{tpu_custom_call.1} parent=11 // pred_check
          %p319 = pneg %p68
        $region14: #{tpu_custom_call.1} parent=11 // pred_check_branch
          %321 = sbr.rel (%p319) target = $region16
        $region15: #{tpu_custom_call.1} parent=11 // pred_region
          _
        $region16: #{tpu_custom_call.1} parent=11 // pred_fallthru
          _
        // Predicated region
        $region17: #{tpu_custom_call.1} parent=11 // pred_check
          %p322 = pneg %p89
        $region18: #{tpu_custom_call.1} parent=11 // pred_check_branch
          %324 = sbr.rel (%p322) target = $region20
        $region19: #{tpu_custom_call.1} parent=11 // pred_region
          _
        $region20: #{tpu_custom_call.1} parent=11 // pred_fallthru
          _
        // Predicated region
        $region21: #{tpu_custom_call.1} parent=11 // pred_check
          %p325 = pneg %p110
        $region22: #{tpu_custom_call.1} parent=11 // pred_check_branch
          %327 = sbr.rel (%p325) target = $region24
        $region23: #{tpu_custom_call.1} parent=11 // pred_region
          _
        $region24: #{tpu_custom_call.1} parent=11 // pred_fallthru
          _
        // Predicated region
        $region25: #{tpu_custom_call.1} parent=11 // pred_check
          %p328 = pneg %p131
        $region26: #{tpu_custom_call.1} parent=11 // pred_check_branch
          %330 = sbr.rel (%p328) target = $region28
        $region27: #{tpu_custom_call.1} parent=11 // pred_region
          _
        $region28: #{tpu_custom_call.1} parent=11 // pred_fallthru
          _
        // Predicated region
        $region29: #{tpu_custom_call.1} parent=11 // pred_check
          %p331 = pneg %p152
        $region30: #{tpu_custom_call.1} parent=11 // pred_check_branch
          %333 = sbr.rel (%p331) target = $region32
        $region31: #{tpu_custom_call.1} parent=11 // pred_region
          _
        $region32: #{tpu_custom_call.1} parent=11 // pred_fallthru
          _
        // Predicated region
        $region33: #{tpu_custom_call.1} parent=11 // pred_check
          %p334 = pneg %p173
        $region34: #{tpu_custom_call.1} parent=11 // pred_check_branch
          %336 = sbr.rel (%p334) target = $region36
        $region35: #{tpu_custom_call.1} parent=11 // pred_region
          _
        $region36: #{tpu_custom_call.1} parent=11 // pred_fallthru
          _
        // Predicated region
        $region37: #{tpu_custom_call.1} parent=11 // pred_check
          %p337 = pneg %p194
        $region38: #{tpu_custom_call.1} parent=11 // pred_check_branch
          %339 = sbr.rel (%p337) target = $region40
        $region39: #{tpu_custom_call.1} parent=11 // pred_region
          _
        $region40: #{tpu_custom_call.1} parent=11 // pred_fallthru
          _
        // Predicated region
        $region41: #{tpu_custom_call.1} parent=11 // pred_check
          %p340 = pneg %p215
        $region42: #{tpu_custom_call.1} parent=11 // pred_check_branch
          %342 = sbr.rel (%p340) target = $region44
        $region43: #{tpu_custom_call.1} parent=11 // pred_region
          _
        $region44: #{tpu_custom_call.1} parent=11 // pred_fallthru
          _
        // Predicated region
        $region45: #{tpu_custom_call.1} parent=11 // pred_check
          %p343 = pneg %p236
        $region46: #{tpu_custom_call.1} parent=11 // pred_check_branch
          %345 = sbr.rel (%p343) target = $region48
        $region47: #{tpu_custom_call.1} parent=11 // pred_region
          _
        $region48: #{tpu_custom_call.1} parent=11 // pred_fallthru
          _
        // Predicated region
        $region49: #{tpu_custom_call.1} parent=11 // pred_check
          %p346 = pneg %p257
        $region50: #{tpu_custom_call.1} parent=11 // pred_check_branch
          %348 = sbr.rel (%p346) target = $region52
        $region51: #{tpu_custom_call.1} parent=11 // pred_region
          _
        $region52: #{tpu_custom_call.1} parent=11 // pred_fallthru
          _
        // Predicated region
        $region53: #{tpu_custom_call.1} parent=11 // pred_check
          %p349 = pneg %p278
        $region54: #{tpu_custom_call.1} parent=11 // pred_check_branch
          %351 = sbr.rel (%p349) target = $region56
        $region55: #{tpu_custom_call.1} parent=11 // pred_region
          _
        $region56: #{tpu_custom_call.1} parent=11 // pred_fallthru
          _
      $region12: #{tpu_custom_call.1} parent=5 // pred_fallthru
        _
      %p352 = scmp.lt.s32.totalorder %s21, 2
      // Predicated region
      $region57: #{tpu_custom_call.1} parent=5 // pred_check
        %p353 = pneg %p352
      $region58: #{tpu_custom_call.1} parent=5 // pred_check_branch
        %355 = sbr.rel (%p353) target = $region60
      $region59: #{tpu_custom_call.1} parent=5 // pred_region
        // Predicated region
        $region61: #{tpu_custom_call.1} parent=59 // pred_check
          %p356 = pneg %p41
        $region62: #{tpu_custom_call.1} parent=59 // pred_check_branch
          %358 = sbr.rel (%p356) target = $region64
        $region63: #{tpu_custom_call.1} parent=59 // pred_region
          %p359 = scmp.lt.s32.totalorder %s21, 1
          %s360 = scalar_select %p359, %s21, 1
          %s361 = smul.addr %s360, 8
          %s362 = scalar_lea.vmem %s0, %s361
        $region64: #{tpu_custom_call.1} parent=59 // pred_fallthru
          _
      $region60: #{tpu_custom_call.1} parent=5 // pred_fallthru
        _
      %p363 = scmp.le.s32.totalorder 1, %s21
      %p364 = scmp.lt.s32.totalorder %s21, 3
      %p365 = pnand %p363, %p364
      %p366 = pneg %p365
      // Predicated region
      $region65: #{tpu_custom_call.1} parent=5 // pred_check
        _
      $region66: #{tpu_custom_call.1} parent=5 // pred_check_branch
        %368 = sbr.rel (%p365) target = $region68
      $region67: #{tpu_custom_call.1} parent=5 // pred_region
        %s369 = ssub.s32 %s21, 1
        %p370 = scmp.lt.s32.totalorder %s26, 1
        %s371 = scalar_select %p370, %s26, 1
        %s372 = smul.addr %s371, 8
        %s373 = scalar_lea.vmem %s0, %s372
        %p374 = pneg %p47
        %p375 = pneg %p44
        %p376 = pneg %p68
        %p377 = pneg %p65
        %p378 = pneg %p89
        %p379 = pneg %p86
        %p380 = pneg %p110
        %p381 = pneg %p107
        %p382 = pneg %p131
        %p383 = pneg %p128
        %p384 = pneg %p152
        %p385 = pneg %p149
        %p386 = pneg %p173
        %p387 = pneg %p170
        %p388 = pneg %p194
        %p389 = pneg %p191
        %p390 = pneg %p215
        %p391 = pneg %p212
        %p392 = pneg %p236
        %p393 = pneg %p233
        %p394 = pneg %p257
        %p395 = pneg %p254
        %p396 = pneg %p278
        %p397 = pneg %p275
        %p398 = pneg %p304
        %p399 = pneg %p301
        %s400 = sand.u32 %s291, 1
        %s401 = scalar_lea.sflag [#allocation3], %s400
        %s402 = sand.u32 %s291, 1
        %s403 = smul.addr %s402, 8
        %s404 = scalar_lea.vmem [#allocation2], %s403
        %p405 = scmp.lt.s32.totalorder %s26, 1
        %s406 = scalar_select %p405, %s26, 1
        %s407 = smul.addr %s406, 8
        %s408 = scalar_lea.vmem %s0, %s407
        %v410 = vld [vmem:[%s408] sm:$0xff]
        %v411 = vlaneseq
        %v412 = vand.u32 %v411, 127
        %vm413 = vcmp.lt.s32.totalorder %v412, 32
        %v414 = vld [vmem:[%s1] sm:$0x1]
        %v415 = vld [vmem:[%s2] sm:$0x1]
        %416 = vadd.xlane.f32.xlu0 %v410
        %v417 = vpop.xlane.xlu0 %416
        %v418 = vmul.f32 %v417, 0.03125
        %v419 = vsub.f32 %v410, %v418
        %v420 = vsel %vm413, %v419, 0.0
        %v421 = vmul.f32 %v420, %v420
        %422 = vadd.xlane.f32.xlu0 %v421
        %v423 = vpop.xlane.xlu0 %422
        %v424 = vmul.f32 %v423, 0.03125
        %v425 = vadd.f32 %v424, 1e-05
        %v426 = vrsqrt.pop %v425
        %v427 = vmul.f32 %v420, %v426
        %v429 = vlaneseq
        %v430 = vshrl.u32 %v429, 7
        %v431 = vsub.s32 0, %v430
        %v432 = vrot.slane %v414, %v431
        %v434 = vmul.f32 %v427, %v432
        %v436 = vlaneseq
        %v437 = vshrl.u32 %v436, 7
        %v438 = vsub.s32 0, %v437
        %v439 = vrot.slane %v415, %v438
        %v441 = vadd.f32 %v434, %v439
        %v442 = vpack.c.bf16 %v441, %v441
        %v443 = vld [vmem:[%s3] sm:$0xf]
        %v444 = vld [vmem:[%s3 + $0x4] sm:$0xf]
        %v445 = vld [vmem:[%s3 + $0x8] sm:$0xf]
        %v446 = vld [vmem:[%s3 + $0xc] sm:$0xf]
        %v447 = vld [vmem:[%s3 + $0x10] sm:$0xf]
        %v448 = vld [vmem:[%s3 + $0x14] sm:$0xf]
        %v449 = vld [vmem:[%s3 + $0x18] sm:$0xf]
        %v450 = vld [vmem:[%s3 + $0x1c] sm:$0xf]
        %v451 = vld [vmem:[%s3 + $0x20] sm:$0xf]
        %v452 = vld [vmem:[%s3 + $0x24] sm:$0xf]
        %v453 = vld [vmem:[%s3 + $0x28] sm:$0xf]
        %v454 = vld [vmem:[%s3 + $0x2c] sm:$0xf]
        %v455 = vld [vmem:[%s3 + $0x30] sm:$0xf]
        %v456 = vld [vmem:[%s3 + $0x34] sm:$0xf]
        %v457 = vld [vmem:[%s3 + $0x38] sm:$0xf]
        %v458 = vld [vmem:[%s3 + $0x3c] sm:$0xf]
        %v459 = vld [vmem:[%s3 + $0x40] sm:$0xf]
        %v460 = vld [vmem:[%s3 + $0x44] sm:$0xf]
        %v461 = vld [vmem:[%s3 + $0x48] sm:$0xf]
        %v462 = vld [vmem:[%s3 + $0x4c] sm:$0xf]
        %v463 = vld [vmem:[%s3 + $0x50] sm:$0xf]
        %v464 = vld [vmem:[%s3 + $0x54] sm:$0xf]
        %v465 = vld [vmem:[%s3 + $0x58] sm:$0xf]
        %v466 = vld [vmem:[%s3 + $0x5c] sm:$0xf]
        %v467 = vld [vmem:[%s3 + $0x60] sm:$0xf]
        %v468 = vld [vmem:[%s3 + $0x64] sm:$0xf]
        %v469 = vld [vmem:[%s3 + $0x68] sm:$0xf]
        %v470 = vld [vmem:[%s3 + $0x6c] sm:$0xf]
        %v471 = vld [vmem:[%s3 + $0x70] sm:$0xf]
        %v472 = vld [vmem:[%s3 + $0x74] sm:$0xf]
        %v473 = vld [vmem:[%s3 + $0x78] sm:$0xf]
        %v474 = vld [vmem:[%s3 + $0x7c] sm:$0xf]
        %v475 = vld [vmem:[%s3 + $0x80] sm:$0xf]
        %v476 = vld [vmem:[%s3 + $0x84] sm:$0xf]
        %v477 = vld [vmem:[%s3 + $0x88] sm:$0xf]
        %v478 = vld [vmem:[%s3 + $0x8c] sm:$0xf]
        %v479 = vld [vmem:[%s3 + $0x90] sm:$0xf]
        %v480 = vld [vmem:[%s3 + $0x94] sm:$0xf]
        %v481 = vld [vmem:[%s3 + $0x98] sm:$0xf]
        %v482 = vld [vmem:[%s3 + $0x9c] sm:$0xf]
        %v483 = vld [vmem:[%s3 + $0xa0] sm:$0xf]
        %v484 = vld [vmem:[%s3 + $0xa4] sm:$0xf]
        %v485 = vld [vmem:[%s3 + $0xa8] sm:$0xf]
        %v486 = vld [vmem:[%s3 + $0xac] sm:$0xf]
        %v487 = vld [vmem:[%s3 + $0xb0] sm:$0xf]
        %v488 = vld [vmem:[%s3 + $0xb4] sm:$0xf]
        %v489 = vld [vmem:[%s3 + $0xb8] sm:$0xf]
        %v490 = vld [vmem:[%s3 + $0xbc] sm:$0xf]
        %v491 = vld [vmem:[%s3 + $0xc0] sm:$0xf]
        %v492 = vld [vmem:[%s3 + $0xc4] sm:$0xf]
        %v493 = vld [vmem:[%s3 + $0xc8] sm:$0xf]
        %v494 = vld [vmem:[%s3 + $0xcc] sm:$0xf]
        %v495 = vld [vmem:[%s3 + $0xd0] sm:$0xf]
        %v496 = vld [vmem:[%s3 + $0xd4] sm:$0xf]
        %v497 = vld [vmem:[%s3 + $0xd8] sm:$0xf]
        %v498 = vld [vmem:[%s3 + $0xdc] sm:$0xf]
        %v499 = vld [vmem:[%s3 + $0xe0] sm:$0xf]
        %v500 = vld [vmem:[%s3 + $0xe4] sm:$0xf]
        %v501 = vld [vmem:[%s3 + $0xe8] sm:$0xf]
        %v502 = vld [vmem:[%s3 + $0xec] sm:$0xf]
        %v503 = vld [vmem:[%s3 + $0xf0] sm:$0xf]
        %v504 = vld [vmem:[%s3 + $0xf4] sm:$0xf]
        %v505 = vld [vmem:[%s3 + $0xf8] sm:$0xf]
        %v506 = vld [vmem:[%s3 + $0xfc] sm:$0xf]
        %v507 = vld [vmem:[%s4] sm:$0x1]
        %v508 = vld [vmem:[%s4 + $0x1] sm:$0x1]
        %v509 = vld [vmem:[%s4 + $0x2] sm:$0x1]
        %v510 = vld [vmem:[%s4 + $0x3] sm:$0x1]
        %v515 = vlaneseq
        %v516 = vshrl.u32 %v515, 7
        %v517 = vsub.s32 0, %v516
        %v518 = vrot.slane %v507, %v517
        %v519 = vlaneseq
        %v520 = vshrl.u32 %v519, 7
        %v521 = vsub.s32 0, %v520
        %v522 = vrot.slane %v508, %v521
        %v523 = vlaneseq
        %v524 = vshrl.u32 %v523, 7
        %v525 = vsub.s32 0, %v524
        %v526 = vrot.slane %v509, %v525
        %v527 = vlaneseq
        %v528 = vshrl.u32 %v527, 7
        %v529 = vsub.s32 0, %v528
        %v530 = vrot.slane %v510, %v529
        %v551 = vunpack.c.l.b16 %v443
        %v552 = vunpack.c.l.b16 %v444
        %v553 = vunpack.c.l.b16 %v445
        %v554 = vunpack.c.l.b16 %v446
        %v555 = vunpack.c.l.b16 %v447
        %v556 = vunpack.c.l.b16 %v448
        %v557 = vunpack.c.l.b16 %v449
        %v558 = vunpack.c.l.b16 %v450
        %v559 = vunpack.c.l.b16 %v451
        %v560 = vunpack.c.l.b16 %v452
        %v561 = vunpack.c.l.b16 %v453
        %v562 = vunpack.c.l.b16 %v454
        %v563 = vunpack.c.l.b16 %v455
        %v564 = vunpack.c.l.b16 %v456
        %v565 = vunpack.c.l.b16 %v457
        %v566 = vunpack.c.l.b16 %v458
        %v567 = vpack.c.b16 %v552, %v551
        %v568 = vpack.c.b16 %v554, %v553
        %v569 = vpack.c.b16 %v556, %v555
        %v570 = vpack.c.b16 %v558, %v557
        %v571 = vpack.c.b16 %v560, %v559
        %v572 = vpack.c.b16 %v562, %v561
        %v573 = vpack.c.b16 %v564, %v563
        %v574 = vpack.c.b16 %v566, %v565
        %583 = vmatprep.subr.bf16.mxu0 0
        %584 = vmatpush1.bf16.msra.mxu0 %v574
        %585 = vmatprep.subr.bf16.mxu0 0
        %586 = vmatpush1.bf16.msra.mxu0 %v573
        %587 = vmatprep.subr.bf16.mxu0 0
        %588 = vmatpush1.bf16.msra.mxu0 %v572
        %589 = vmatprep.subr.bf16.mxu0 0
        %590 = vmatpush1.bf16.msra.mxu0 %v571
        %591 = vmatprep.subr.bf16.mxu0 0
        %592 = vmatpush1.bf16.msra.mxu0 %v570
        %593 = vmatprep.subr.bf16.mxu0 0
        %594 = vmatpush1.bf16.msra.mxu0 %v569
        %595 = vmatprep.subr.bf16.mxu0 0
        %596 = vmatpush1.bf16.msra.mxu0 %v568
        %597 = vmatprep.subr.bf16.mxu0 0
        %598 = vmatpush1.bf16.msra.mxu0 %v567
        %599 = vmatprep.subr.bf16.mxu0 0
        %600 = vmatpush2.bf16.msra.mxu0 0
        %601 = vmatprep.subr.bf16.mxu0 0
        %602 = vmatpush2.bf16.msra.mxu0 0
        %603 = vmatprep.subr.bf16.mxu0 0
        %604 = vmatpush2.bf16.msra.mxu0 0
        %605 = vmatprep.subr.bf16.mxu0 0
        %606 = vmatpush2.bf16.msra.mxu0 0
        %607 = vmatprep.subr.bf16.mxu0 0
        %608 = vmatpush2.bf16.msra.mxu0 0
        %609 = vmatprep.subr.bf16.mxu0 0
        %610 = vmatpush2.bf16.msra.mxu0 0
        %611 = vmatprep.subr.bf16.mxu0 0
        %612 = vmatpush2.bf16.msra.mxu0 0
        %613 = vmatprep.subr.bf16.mxu0 0
        %614 = vmatpush2.bf16.msra.mxu0 0
        %615 = vmatprep.mubr.bf16.mxu0 0
        %616 = vmatmul.mubr.bf16.gmra.mxu0 %v442
        %v617 = vpop.f32.mrf.mxu0
        %v618 = vadd.f32 %v518, %v617
        %v619 = vpop.f32.mrf.mxu0
        %v620 = vpop.f32.mrf.mxu0
        %v621 = vpop.f32.mrf.mxu0
        %622 = vdwg.mxu0
        %v639 = vunpack.c.l.b16 %v459
        %v640 = vunpack.c.l.b16 %v460
        %v641 = vunpack.c.l.b16 %v461
        %v642 = vunpack.c.l.b16 %v462
        %v643 = vunpack.c.l.b16 %v463
        %v644 = vunpack.c.l.b16 %v464
        %v645 = vunpack.c.l.b16 %v465
        %v646 = vunpack.c.l.b16 %v466
        %v647 = vunpack.c.l.b16 %v467
        %v648 = vunpack.c.l.b16 %v468
        %v649 = vunpack.c.l.b16 %v469
        %v650 = vunpack.c.l.b16 %v470
        %v651 = vunpack.c.l.b16 %v471
        %v652 = vunpack.c.l.b16 %v472
        %v653 = vunpack.c.l.b16 %v473
        %v654 = vunpack.c.l.b16 %v474
        %v655 = vpack.c.b16 %v640, %v639
        %v656 = vpack.c.b16 %v642, %v641
        %v657 = vpack.c.b16 %v644, %v643
        %v658 = vpack.c.b16 %v646, %v645
        %v659 = vpack.c.b16 %v648, %v647
        %v660 = vpack.c.b16 %v650, %v649
        %v661 = vpack.c.b16 %v652, %v651
        %v662 = vpack.c.b16 %v654, %v653
        %671 = vmatprep.subr.bf16.mxu0 0
        %672 = vmatpush1.bf16.msra.mxu0 %v662
        %673 = vmatprep.subr.bf16.mxu0 0
        %674 = vmatpush1.bf16.msra.mxu0 %v661
        %675 = vmatprep.subr.bf16.mxu0 0
        %676 = vmatpush1.bf16.msra.mxu0 %v660
        %677 = vmatprep.subr.bf16.mxu0 0
        %678 = vmatpush1.bf16.msra.mxu0 %v659
        %679 = vmatprep.subr.bf16.mxu0 0
        %680 = vmatpush1.bf16.msra.mxu0 %v658
        %681 = vmatprep.subr.bf16.mxu0 0
        %682 = vmatpush1.bf16.msra.mxu0 %v657
        %683 = vmatprep.subr.bf16.mxu0 0
        %684 = vmatpush1.bf16.msra.mxu0 %v656
        %685 = vmatprep.subr.bf16.mxu0 0
        %686 = vmatpush1.bf16.msra.mxu0 %v655
        %687 = vmatprep.subr.bf16.mxu0 0
        %688 = vmatpush2.bf16.msra.mxu0 0
        %689 = vmatprep.subr.bf16.mxu0 0
        %690 = vmatpush2.bf16.msra.mxu0 0
        %691 = vmatprep.subr.bf16.mxu0 0
        %692 = vmatpush2.bf16.msra.mxu0 0
        %693 = vmatprep.subr.bf16.mxu0 0
        %694 = vmatpush2.bf16.msra.mxu0 0
        %695 = vmatprep.subr.bf16.mxu0 0
        %696 = vmatpush2.bf16.msra.mxu0 0
        %697 = vmatprep.subr.bf16.mxu0 0
        %698 = vmatpush2.bf16.msra.mxu0 0
        %699 = vmatprep.subr.bf16.mxu0 0
        %700 = vmatpush2.bf16.msra.mxu0 0
        %701 = vmatprep.subr.bf16.mxu0 0
        %702 = vmatpush2.bf16.msra.mxu0 0
        %703 = vmatprep.mubr.bf16.mxu0 0
        %704 = vmatmul.mubr.bf16.gmra.mxu0 %v442
        %v705 = vpop.f32.mrf.mxu0
        %v706 = vadd.f32 %v522, %v705
        %v707 = vpop.f32.mrf.mxu0
        %v708 = vpop.f32.mrf.mxu0
        %v709 = vpop.f32.mrf.mxu0
        %710 = vdwg.mxu0
        %v727 = vunpack.c.l.b16 %v475
        %v728 = vunpack.c.l.b16 %v476
        %v729 = vunpack.c.l.b16 %v477
        %v730 = vunpack.c.l.b16 %v478
        %v731 = vunpack.c.l.b16 %v479
        %v732 = vunpack.c.l.b16 %v480
        %v733 = vunpack.c.l.b16 %v481
        %v734 = vunpack.c.l.b16 %v482
        %v735 = vunpack.c.l.b16 %v483
        %v736 = vunpack.c.l.b16 %v484
        %v737 = vunpack.c.l.b16 %v485
        %v738 = vunpack.c.l.b16 %v486
        %v739 = vunpack.c.l.b16 %v487
        %v740 = vunpack.c.l.b16 %v488
        %v741 = vunpack.c.l.b16 %v489
        %v742 = vunpack.c.l.b16 %v490
        %v743 = vpack.c.b16 %v728, %v727
        %v744 = vpack.c.b16 %v730, %v729
        %v745 = vpack.c.b16 %v732, %v731
        %v746 = vpack.c.b16 %v734, %v733
        %v747 = vpack.c.b16 %v736, %v735
        %v748 = vpack.c.b16 %v738, %v737
        %v749 = vpack.c.b16 %v740, %v739
        %v750 = vpack.c.b16 %v742, %v741
        %759 = vmatprep.subr.bf16.mxu0 0
        %760 = vmatpush1.bf16.msra.mxu0 %v750
        %761 = vmatprep.subr.bf16.mxu0 0
        %762 = vmatpush1.bf16.msra.mxu0 %v749
        %763 = vmatprep.subr.bf16.mxu0 0
        %764 = vmatpush1.bf16.msra.mxu0 %v748
        %765 = vmatprep.subr.bf16.mxu0 0
        %766 = vmatpush1.bf16.msra.mxu0 %v747
        %767 = vmatprep.subr.bf16.mxu0 0
        %768 = vmatpush1.bf16.msra.mxu0 %v746
        %769 = vmatprep.subr.bf16.mxu0 0
        %770 = vmatpush1.bf16.msra.mxu0 %v745
        %771 = vmatprep.subr.bf16.mxu0 0
        %772 = vmatpush1.bf16.msra.mxu0 %v744
        %773 = vmatprep.subr.bf16.mxu0 0
        %774 = vmatpush1.bf16.msra.mxu0 %v743
        %775 = vmatprep.subr.bf16.mxu0 0
        %776 = vmatpush2.bf16.msra.mxu0 0
        %777 = vmatprep.subr.bf16.mxu0 0
        %778 = vmatpush2.bf16.msra.mxu0 0
        %779 = vmatprep.subr.bf16.mxu0 0
        %780 = vmatpush2.bf16.msra.mxu0 0
        %781 = vmatprep.subr.bf16.mxu0 0
        %782 = vmatpush2.bf16.msra.mxu0 0
        %783 = vmatprep.subr.bf16.mxu0 0
        %784 = vmatpush2.bf16.msra.mxu0 0
        %785 = vmatprep.subr.bf16.mxu0 0
        %786 = vmatpush2.bf16.msra.mxu0 0
        %787 = vmatprep.subr.bf16.mxu0 0
        %788 = vmatpush2.bf16.msra.mxu0 0
        %789 = vmatprep.subr.bf16.mxu0 0
        %790 = vmatpush2.bf16.msra.mxu0 0
        %791 = vmatprep.mubr.bf16.mxu0 0
        %792 = vmatmul.mubr.bf16.gmra.mxu0 %v442
        %v793 = vpop.f32.mrf.mxu0
        %v794 = vadd.f32 %v526, %v793
        %v795 = vpop.f32.mrf.mxu0
        %v796 = vpop.f32.mrf.mxu0
        %v797 = vpop.f32.mrf.mxu0
        %798 = vdwg.mxu0
        %v815 = vunpack.c.l.b16 %v491
        %v816 = vunpack.c.l.b16 %v492
        %v817 = vunpack.c.l.b16 %v493
        %v818 = vunpack.c.l.b16 %v494
        %v819 = vunpack.c.l.b16 %v495
        %v820 = vunpack.c.l.b16 %v496
        %v821 = vunpack.c.l.b16 %v497
        %v822 = vunpack.c.l.b16 %v498
        %v823 = vunpack.c.l.b16 %v499
        %v824 = vunpack.c.l.b16 %v500
        %v825 = vunpack.c.l.b16 %v501
        %v826 = vunpack.c.l.b16 %v502
        %v827 = vunpack.c.l.b16 %v503
        %v828 = vunpack.c.l.b16 %v504
        %v829 = vunpack.c.l.b16 %v505
        %v830 = vunpack.c.l.b16 %v506
        %v831 = vpack.c.b16 %v816, %v815
        %v832 = vpack.c.b16 %v818, %v817
        %v833 = vpack.c.b16 %v820, %v819
        %v834 = vpack.c.b16 %v822, %v821
        %v835 = vpack.c.b16 %v824, %v823
        %v836 = vpack.c.b16 %v826, %v825
        %v837 = vpack.c.b16 %v828, %v827
        %v838 = vpack.c.b16 %v830, %v829
        %847 = vmatprep.subr.bf16.mxu0 0
        %848 = vmatpush1.bf16.msra.mxu0 %v838
        %849 = vmatprep.subr.bf16.mxu0 0
        %850 = vmatpush1.bf16.msra.mxu0 %v837
        %851 = vmatprep.subr.bf16.mxu0 0
        %852 = vmatpush1.bf16.msra.mxu0 %v836
        %853 = vmatprep.subr.bf16.mxu0 0
        %854 = vmatpush1.bf16.msra.mxu0 %v835
        %855 = vmatprep.subr.bf16.mxu0 0
        %856 = vmatpush1.bf16.msra.mxu0 %v834
        %857 = vmatprep.subr.bf16.mxu0 0
        %858 = vmatpush1.bf16.msra.mxu0 %v833
        %859 = vmatprep.subr.bf16.mxu0 0
        %860 = vmatpush1.bf16.msra.mxu0 %v832
        %861 = vmatprep.subr.bf16.mxu0 0
        %862 = vmatpush1.bf16.msra.mxu0 %v831
        %863 = vmatprep.subr.bf16.mxu0 0
        %864 = vmatpush2.bf16.msra.mxu0 0
        %865 = vmatprep.subr.bf16.mxu0 0
        %866 = vmatpush2.bf16.msra.mxu0 0
        %867 = vmatprep.subr.bf16.mxu0 0
        %868 = vmatpush2.bf16.msra.mxu0 0
        %869 = vmatprep.subr.bf16.mxu0 0
        %870 = vmatpush2.bf16.msra.mxu0 0
        %871 = vmatprep.subr.bf16.mxu0 0
        %872 = vmatpush2.bf16.msra.mxu0 0
        %873 = vmatprep.subr.bf16.mxu0 0
        %874 = vmatpush2.bf16.msra.mxu0 0
        %875 = vmatprep.subr.bf16.mxu0 0
        %876 = vmatpush2.bf16.msra.mxu0 0
        %877 = vmatprep.subr.bf16.mxu0 0
        %878 = vmatpush2.bf16.msra.mxu0 0
        %879 = vmatprep.mubr.bf16.mxu0 0
        %880 = vmatmul.mubr.bf16.gmra.mxu0 %v442
        %v881 = vpop.f32.mrf.mxu0
        %v882 = vadd.f32 %v530, %v881
        %v883 = vpop.f32.mrf.mxu0
        %v884 = vpop.f32.mrf.mxu0
        %v885 = vpop.f32.mrf.mxu0
        %886 = vdwg.mxu0
        %v887 = vmul.f32 %v618, 0.35355338
        %v888 = vmul.f32 %v706, 0.35355338
        %v889 = vmul.f32 %v794, 0.35355338
        %v890 = vmul.f32 %v882, 0.35355338
        %v891 = vpack.c.bf16 %v887, %v887
        %v892 = vpack.c.bf16 %v888, %v888
        %v893 = vpack.c.bf16 %v889, %v889
        %v894 = vpack.c.bf16 %v890, %v890
        %v895 = vpack.c.bf16 %v618, %v618
        %v896 = vpack.c.bf16 %v706, %v706
        %v897 = vpack.c.bf16 %v794, %v794
        %v898 = vpack.c.bf16 %v882, %v882
        %900 = vrot.lane.b32.xlu0 %v895, 96
        %v901 = vpop.permute.xlu0 %900
        %vm902 = vcmask 261120
        %v904 = vsel %vm902, %v891, 0
        %v907 = vsel %vm902, %v901, 0
        %909 = vmatprep.subr.bf16.mxu0 0
        %910 = vmatpush1.bf16.xpose.msra.mxu0 0
        %911 = vmatprep.subr.bf16.mxu0 0
        %912 = vmatpush1.bf16.xpose.msra.mxu0 0
        %913 = vmatprep.subr.bf16.mxu0 0
        %914 = vmatpush1.bf16.xpose.msra.mxu0 0
        %915 = vmatprep.subr.bf16.mxu0 0
        %916 = vmatpush1.bf16.xpose.msra.mxu0 0
        %917 = vmatprep.subr.bf16.mxu0 0
        %918 = vmatpush1.bf16.xpose.msra.mxu0 0
        %919 = vmatprep.subr.bf16.mxu0 0
        %920 = vmatpush1.bf16.xpose.msra.mxu0 0
        %921 = vmatprep.subr.bf16.mxu0 0
        %922 = vmatpush1.bf16.xpose.msra.mxu0 0
        %923 = vmatprep.subr.bf16.mxu0 0
        %924 = vmatpush1.bf16.xpose.msra.mxu0 %v907
        %925 = vmatprep.subr.bf16.mxu0 0
        %926 = vmatpush2.bf16.xpose.msra.mxu0 0
        %927 = vmatprep.subr.bf16.mxu0 0
        %928 = vmatpush2.bf16.xpose.msra.mxu0 0
        %929 = vmatprep.subr.bf16.mxu0 0
        %930 = vmatpush2.bf16.xpose.msra.mxu0 0
        %931 = vmatprep.subr.bf16.mxu0 0
        %932 = vmatpush2.bf16.xpose.msra.mxu0 0
        %933 = vmatprep.subr.bf16.mxu0 0
        %934 = vmatpush2.bf16.xpose.msra.mxu0 0
        %935 = vmatprep.subr.bf16.mxu0 0
        %936 = vmatpush2.bf16.xpose.msra.mxu0 0
        %937 = vmatprep.subr.bf16.mxu0 0
        %938 = vmatpush2.bf16.xpose.msra.mxu0 0
        %939 = vmatprep.subr.bf16.mxu0 0
        %940 = vmatpush2.bf16.xpose.msra.mxu0 0
        %941 = vmatprep.mubr.bf16.mxu0 0
        %942 = vmatmul.mubr.bf16.gmra.mxu0 %v904
        %v943 = vpop.f32.mrf.mxu0
        %v944 = vadd.f32 0.0, %v943
        %v945 = vpop.f32.mrf.mxu0
        %v946 = vpop.f32.mrf.mxu0
        %v947 = vpop.f32.mrf.mxu0
        %948 = vdwg.mxu0
        %950 = vrot.lane.b32.xlu0 %v896, 96
        %v951 = vpop.permute.xlu0 %950
        %v953 = vsel %vm902, %v892, 0
        %v956 = vsel %vm902, %v951, 0
        %958 = vmatprep.subr.bf16.mxu0 0
        %959 = vmatpush1.bf16.xpose.msra.mxu0 0
        %960 = vmatprep.subr.bf16.mxu0 0
        %961 = vmatpush1.bf16.xpose.msra.mxu0 0
        %962 = vmatprep.subr.bf16.mxu0 0
        %963 = vmatpush1.bf16.xpose.msra.mxu0 0
        %964 = vmatprep.subr.bf16.mxu0 0
        %965 = vmatpush1.bf16.xpose.msra.mxu0 0
        %966 = vmatprep.subr.bf16.mxu0 0
        %967 = vmatpush1.bf16.xpose.msra.mxu0 0
        %968 = vmatprep.subr.bf16.mxu0 0
        %969 = vmatpush1.bf16.xpose.msra.mxu0 0
        %970 = vmatprep.subr.bf16.mxu0 0
        %971 = vmatpush1.bf16.xpose.msra.mxu0 0
        %972 = vmatprep.subr.bf16.mxu0 0
        %973 = vmatpush1.bf16.xpose.msra.mxu0 %v956
        %974 = vmatprep.subr.bf16.mxu0 0
        %975 = vmatpush2.bf16.xpose.msra.mxu0 0
        %976 = vmatprep.subr.bf16.mxu0 0
        %977 = vmatpush2.bf16.xpose.msra.mxu0 0
        %978 = vmatprep.subr.bf16.mxu0 0
        %979 = vmatpush2.bf16.xpose.msra.mxu0 0
        %980 = vmatprep.subr.bf16.mxu0 0
        %981 = vmatpush2.bf16.xpose.msra.mxu0 0
        %982 = vmatprep.subr.bf16.mxu0 0
        %983 = vmatpush2.bf16.xpose.msra.mxu0 0
        %984 = vmatprep.subr.bf16.mxu0 0
        %985 = vmatpush2.bf16.xpose.msra.mxu0 0
        %986 = vmatprep.subr.bf16.mxu0 0
        %987 = vmatpush2.bf16.xpose.msra.mxu0 0
        %988 = vmatprep.subr.bf16.mxu0 0
        %989 = vmatpush2.bf16.xpose.msra.mxu0 0
        %990 = vmatprep.mubr.bf16.mxu0 0
        %991 = vmatmul.mubr.bf16.gmra.mxu0 %v953
        %v992 = vpop.f32.mrf.mxu0
        %v993 = vadd.f32 0.0, %v992
        %v994 = vpop.f32.mrf.mxu0
        %v995 = vpop.f32.mrf.mxu0
        %v996 = vpop.f32.mrf.mxu0
        %997 = vdwg.mxu0
        %999 = vrot.lane.b32.xlu0 %v897, 96
        %v1000 = vpop.permute.xlu0 %999
        %v1002 = vsel %vm902, %v893, 0
        %v1005 = vsel %vm902, %v1000, 0
        %1007 = vmatprep.subr.bf16.mxu0 0
        %1008 = vmatpush1.bf16.xpose.msra.mxu0 0
        %1009 = vmatprep.subr.bf16.mxu0 0
        %1010 = vmatpush1.bf16.xpose.msra.mxu0 0
        %1011 = vmatprep.subr.bf16.mxu0 0
        %1012 = vmatpush1.bf16.xpose.msra.mxu0 0
        %1013 = vmatprep.subr.bf16.mxu0 0
        %1014 = vmatpush1.bf16.xpose.msra.mxu0 0
        %1015 = vmatprep.subr.bf16.mxu0 0
        %1016 = vmatpush1.bf16.xpose.msra.mxu0 0
        %1017 = vmatprep.subr.bf16.mxu0 0
        %1018 = vmatpush1.bf16.xpose.msra.mxu0 0
        %1019 = vmatprep.subr.bf16.mxu0 0
        %1020 = vmatpush1.bf16.xpose.msra.mxu0 0
        %1021 = vmatprep.subr.bf16.mxu0 0
        %1022 = vmatpush1.bf16.xpose.msra.mxu0 %v1005
        %1023 = vmatprep.subr.bf16.mxu0 0
        %1024 = vmatpush2.bf16.xpose.msra.mxu0 0
        %1025 = vmatprep.subr.bf16.mxu0 0
        %1026 = vmatpush2.bf16.xpose.msra.mxu0 0
        %1027 = vmatprep.subr.bf16.mxu0 0
        %1028 = vmatpush2.bf16.xpose.msra.mxu0 0
        %1029 = vmatprep.subr.bf16.mxu0 0
        %1030 = vmatpush2.bf16.xpose.msra.mxu0 0
        %1031 = vmatprep.subr.bf16.mxu0 0
        %1032 = vmatpush2.bf16.xpose.msra.mxu0 0
        %1033 = vmatprep.subr.bf16.mxu0 0
        %1034 = vmatpush2.bf16.xpose.msra.mxu0 0
        %1035 = vmatprep.subr.bf16.mxu0 0
        %1036 = vmatpush2.bf16.xpose.msra.mxu0 0
        %1037 = vmatprep.subr.bf16.mxu0 0
        %1038 = vmatpush2.bf16.xpose.msra.mxu0 0
        %1039 = vmatprep.mubr.bf16.mxu0 0
        %1040 = vmatmul.mubr.bf16.gmra.mxu0 %v1002
        %v1041 = vpop.f32.mrf.mxu0
        %v1042 = vadd.f32 0.0, %v1041
        %v1043 = vpop.f32.mrf.mxu0
        %v1044 = vpop.f32.mrf.mxu0
        %v1045 = vpop.f32.mrf.mxu0
        %1046 = vdwg.mxu0
        %1048 = vrot.lane.b32.xlu0 %v898, 96
        %v1049 = vpop.permute.xlu0 %1048
        %v1051 = vsel %vm902, %v894, 0
        %v1054 = vsel %vm902, %v1049, 0
        %1056 = vmatprep.subr.bf16.mxu0 0
        %1057 = vmatpush1.bf16.xpose.msra.mxu0 0
        %1058 = vmatprep.subr.bf16.mxu0 0
        %1059 = vmatpush1.bf16.xpose.msra.mxu0 0
        %1060 = vmatprep.subr.bf16.mxu0 0
        %1061 = vmatpush1.bf16.xpose.msra.mxu0 0
        %1062 = vmatprep.subr.bf16.mxu0 0
        %1063 = vmatpush1.bf16.xpose.msra.mxu0 0
        %1064 = vmatprep.subr.bf16.mxu0 0
        %1065 = vmatpush1.bf16.xpose.msra.mxu0 0
        %1066 = vmatprep.subr.bf16.mxu0 0
        %1067 = vmatpush1.bf16.xpose.msra.mxu0 0
        %1068 = vmatprep.subr.bf16.mxu0 0
        %1069 = vmatpush1.bf16.xpose.msra.mxu0 0
        %1070 = vmatprep.subr.bf16.mxu0 0
        %1071 = vmatpush1.bf16.xpose.msra.mxu0 %v1054
        %1072 = vmatprep.subr.bf16.mxu0 0
        %1073 = vmatpush2.bf16.xpose.msra.mxu0 0
        %1074 = vmatprep.subr.bf16.mxu0 0
        %1075 = vmatpush2.bf16.xpose.msra.mxu0 0
        %1076 = vmatprep.subr.bf16.mxu0 0
        %1077 = vmatpush2.bf16.xpose.msra.mxu0 0
        %1078 = vmatprep.subr.bf16.mxu0 0
        %1079 = vmatpush2.bf16.xpose.msra.mxu0 0
        %1080 = vmatprep.subr.bf16.mxu0 0
        %1081 = vmatpush2.bf16.xpose.msra.mxu0 0
        %1082 = vmatprep.subr.bf16.mxu0 0
        %1083 = vmatpush2.bf16.xpose.msra.mxu0 0
        %1084 = vmatprep.subr.bf16.mxu0 0
        %1085 = vmatpush2.bf16.xpose.msra.mxu0 0
        %1086 = vmatprep.subr.bf16.mxu0 0
        %1087 = vmatpush2.bf16.xpose.msra.mxu0 0
        %1088 = vmatprep.mubr.bf16.mxu0 0
        %1089 = vmatmul.mubr.bf16.gmra.mxu0 %v1051
        %v1090 = vpop.f32.mrf.mxu0
        %v1091 = vadd.f32 0.0, %v1090
        %v1092 = vpop.f32.mrf.mxu0
        %v1093 = vpop.f32.mrf.mxu0
        %v1094 = vpop.f32.mrf.mxu0
        %1095 = vdwg.mxu0
        %v1096 = vlaneseq
        %v1097 = vshrl.u32 %v1096, 7
        %vm1098 = vcmp.ge.s32.totalorder %v1097, %v412
        %v1099 = vsel %vm1098, 1, 0
        %vm1100 = vcmp.eq.s32.totalorder %v1099, 1
        %v1101 = vsel %vm1100, %v944, -1e+30
        %v1102 = vsel %vm1100, %v993, -1e+30
        %v1103 = vsel %vm1100, %v1042, -1e+30
        %v1104 = vsel %vm1100, %v1091, -1e+30
        %vm1105 = vcmask 64512
        %v1106 = vsel %vm1105, %v1101, -inf
        %1107 = vmax.xlane.f32.xlu0 %v1106
        %v1108 = vpop.xlane.xlu0 %1107
        %v1109 = vsel %vm1105, %v1102, -inf
        %1110 = vmax.xlane.f32.xlu0 %v1109
        %v1111 = vpop.xlane.xlu0 %1110
        %v1112 = vsel %vm1105, %v1103, -inf
        %1113 = vmax.xlane.f32.xlu0 %v1112
        %v1114 = vpop.xlane.xlu0 %1113
        %v1115 = vsel %vm1105, %v1104, -inf
        %1116 = vmax.xlane.f32.xlu0 %v1115
        %v1117 = vpop.xlane.xlu0 %1116
        %v1118 = vsub.f32 %v1101, %v1108
        %v1119 = vsub.f32 %v1102, %v1111
        %v1120 = vsub.f32 %v1103, %v1114
        %v1121 = vsub.f32 %v1104, %v1117
        %v1122 = vmul.f32 %v1118, 1.442695
        %v1123 = vpow.pop %v1122
        %v1124 = vmul.f32 %v1119, 1.442695
        %v1125 = vpow.pop %v1124
        %v1126 = vmul.f32 %v1120, 1.442695
        %v1127 = vpow.pop %v1126
        %v1128 = vmul.f32 %v1121, 1.442695
        %v1129 = vpow.pop %v1128
        %v1130 = vsel %vm1105, %v1123, 0.0
        %1131 = vadd.xlane.f32.xlu0 %v1130
        %v1132 = vpop.xlane.xlu0 %1131
        %v1133 = vsel %vm1105, %v1125, 0.0
        %1134 = vadd.xlane.f32.xlu0 %v1133
        %v1135 = vpop.xlane.xlu0 %1134
        %v1136 = vsel %vm1105, %v1127, 0.0
        %1137 = vadd.xlane.f32.xlu0 %v1136
        %v1138 = vpop.xlane.xlu0 %1137
        %v1139 = vsel %vm1105, %v1129, 0.0
        %1140 = vadd.xlane.f32.xlu0 %v1139
        %v1141 = vpop.xlane.xlu0 %1140
        %v1142 = vrcp.pop %v1132
        %v1143 = vrcp.pop %v1135
        %v1144 = vrcp.pop %v1138
        %v1145 = vrcp.pop %v1141
        %v1146 = vmul.f32 %v1123, %v1142
        %v1147 = vmul.f32 %v1125, %v1143
        %v1148 = vmul.f32 %v1127, %v1144
        %v1149 = vmul.f32 %v1129, %v1145
        %v1150 = vpack.c.bf16 %v1146, %v1146
        %v1151 = vpack.c.bf16 %v1147, %v1147
        %v1152 = vpack.c.bf16 %v1148, %v1148
        %v1153 = vpack.c.bf16 %v1149, %v1149
        %1154 = vrot.lane.b32.xlu0 %v895, 64
        %v1155 = vpop.permute.xlu0 %1154
        %v1157 = vsel %vm1105, %v1150, 0
        %vm1159 = vcmask 1043456
        %v1161 = vsel %vm1159, %v1155, 0
        %1163 = vmatprep.subr.bf16.mxu0 0
        %1164 = vmatpush1.bf16.msra.mxu0 0
        %1165 = vmatprep.subr.bf16.mxu0 0
        %1166 = vmatpush1.bf16.msra.mxu0 0
        %1167 = vmatprep.subr.bf16.mxu0 0
        %1168 = vmatpush1.bf16.msra.mxu0 0
        %1169 = vmatprep.subr.bf16.mxu0 0
        %1170 = vmatpush1.bf16.msra.mxu0 0
        %1171 = vmatprep.subr.bf16.mxu0 0
        %1172 = vmatpush1.bf16.msra.mxu0 0
        %1173 = vmatprep.subr.bf16.mxu0 0
        %1174 = vmatpush1.bf16.msra.mxu0 0
        %1175 = vmatprep.subr.bf16.mxu0 0
        %1176 = vmatpush1.bf16.msra.mxu0 0
        %1177 = vmatprep.subr.bf16.mxu0 0
        %1178 = vmatpush1.bf16.msra.mxu0 %v1161
        %1179 = vmatprep.subr.bf16.mxu0 0
        %1180 = vmatpush2.bf16.msra.mxu0 0
        %1181 = vmatprep.subr.bf16.mxu0 0
        %1182 = vmatpush2.bf16.msra.mxu0 0
        %1183 = vmatprep.subr.bf16.mxu0 0
        %1184 = vmatpush2.bf16.msra.mxu0 0
        %1185 = vmatprep.subr.bf16.mxu0 0
        %1186 = vmatpush2.bf16.msra.mxu0 0
        %1187 = vmatprep.subr.bf16.mxu0 0
        %1188 = vmatpush2.bf16.msra.mxu0 0
        %1189 = vmatprep.subr.bf16.mxu0 0
        %1190 = vmatpush2.bf16.msra.mxu0 0
        %1191 = vmatprep.subr.bf16.mxu0 0
        %1192 = vmatpush2.bf16.msra.mxu0 0
        %1193 = vmatprep.subr.bf16.mxu0 0
        %1194 = vmatpush2.bf16.msra.mxu0 0
        %1195 = vmatprep.mubr.bf16.mxu0 0
        %1196 = vmatmul.mubr.bf16.gmra.mxu0 %v1157
        %v1197 = vpop.f32.mrf.mxu0
        %v1198 = vadd.f32 0.0, %v1197
        %v1199 = vpop.f32.mrf.mxu0
        %v1200 = vpop.f32.mrf.mxu0
        %v1201 = vpop.f32.mrf.mxu0
        %1202 = vdwg.mxu0
        %1203 = vrot.lane.b32.xlu0 %v896, 64
        %v1204 = vpop.permute.xlu0 %1203
        %v1206 = vsel %vm1105, %v1151, 0
        %v1209 = vsel %vm1159, %v1204, 0
        %1211 = vmatprep.subr.bf16.mxu0 0
        %1212 = vmatpush1.bf16.msra.mxu0 0
        %1213 = vmatprep.subr.bf16.mxu0 0
        %1214 = vmatpush1.bf16.msra.mxu0 0
        %1215 = vmatprep.subr.bf16.mxu0 0
        %1216 = vmatpush1.bf16.msra.mxu0 0
        %1217 = vmatprep.subr.bf16.mxu0 0
        %1218 = vmatpush1.bf16.msra.mxu0 0
        %1219 = vmatprep.subr.bf16.mxu0 0
        %1220 = vmatpush1.bf16.msra.mxu0 0
        %1221 = vmatprep.subr.bf16.mxu0 0
        %1222 = vmatpush1.bf16.msra.mxu0 0
        %1223 = vmatprep.subr.bf16.mxu0 0
        %1224 = vmatpush1.bf16.msra.mxu0 0
        %1225 = vmatprep.subr.bf16.mxu0 0
        %1226 = vmatpush1.bf16.msra.mxu0 %v1209
        %1227 = vmatprep.subr.bf16.mxu0 0
        %1228 = vmatpush2.bf16.msra.mxu0 0
        %1229 = vmatprep.subr.bf16.mxu0 0
        %1230 = vmatpush2.bf16.msra.mxu0 0
        %1231 = vmatprep.subr.bf16.mxu0 0
        %1232 = vmatpush2.bf16.msra.mxu0 0
        %1233 = vmatprep.subr.bf16.mxu0 0
        %1234 = vmatpush2.bf16.msra.mxu0 0
        %1235 = vmatprep.subr.bf16.mxu0 0
        %1236 = vmatpush2.bf16.msra.mxu0 0
        %1237 = vmatprep.subr.bf16.mxu0 0
        %1238 = vmatpush2.bf16.msra.mxu0 0
        %1239 = vmatprep.subr.bf16.mxu0 0
        %1240 = vmatpush2.bf16.msra.mxu0 0
        %1241 = vmatprep.subr.bf16.mxu0 0
        %1242 = vmatpush2.bf16.msra.mxu0 0
        %1243 = vmatprep.mubr.bf16.mxu0 0
        %1244 = vmatmul.mubr.bf16.gmra.mxu0 %v1206
        %v1245 = vpop.f32.mrf.mxu0
        %v1246 = vadd.f32 0.0, %v1245
        %v1247 = vpop.f32.mrf.mxu0
        %v1248 = vpop.f32.mrf.mxu0
        %v1249 = vpop.f32.mrf.mxu0
        %1250 = vdwg.mxu0
        %1251 = vrot.lane.b32.xlu0 %v897, 64
        %v1252 = vpop.permute.xlu0 %1251
        %v1254 = vsel %vm1105, %v1152, 0
        %v1257 = vsel %vm1159, %v1252, 0
        %1259 = vmatprep.subr.bf16.mxu0 0
        %1260 = vmatpush1.bf16.msra.mxu0 0
        %1261 = vmatprep.subr.bf16.mxu0 0
        %1262 = vmatpush1.bf16.msra.mxu0 0
        %1263 = vmatprep.subr.bf16.mxu0 0
        %1264 = vmatpush1.bf16.msra.mxu0 0
        %1265 = vmatprep.subr.bf16.mxu0 0
        %1266 = vmatpush1.bf16.msra.mxu0 0
        %1267 = vmatprep.subr.bf16.mxu0 0
        %1268 = vmatpush1.bf16.msra.mxu0 0
        %1269 = vmatprep.subr.bf16.mxu0 0
        %1270 = vmatpush1.bf16.msra.mxu0 0
        %1271 = vmatprep.subr.bf16.mxu0 0
        %1272 = vmatpush1.bf16.msra.mxu0 0
        %1273 = vmatprep.subr.bf16.mxu0 0
        %1274 = vmatpush1.bf16.msra.mxu0 %v1257
        %1275 = vmatprep.subr.bf16.mxu0 0
        %1276 = vmatpush2.bf16.msra.mxu0 0
        %1277 = vmatprep.subr.bf16.mxu0 0
        %1278 = vmatpush2.bf16.msra.mxu0 0
        %1279 = vmatprep.subr.bf16.mxu0 0
        %1280 = vmatpush2.bf16.msra.mxu0 0
        %1281 = vmatprep.subr.bf16.mxu0 0
        %1282 = vmatpush2.bf16.msra.mxu0 0
        %1283 = vmatprep.subr.bf16.mxu0 0
        %1284 = vmatpush2.bf16.msra.mxu0 0
        %1285 = vmatprep.subr.bf16.mxu0 0
        %1286 = vmatpush2.bf16.msra.mxu0 0
        %1287 = vmatprep.subr.bf16.mxu0 0
        %1288 = vmatpush2.bf16.msra.mxu0 0
        %1289 = vmatprep.subr.bf16.mxu0 0
        %1290 = vmatpush2.bf16.msra.mxu0 0
        %1291 = vmatprep.mubr.bf16.mxu0 0
        %1292 = vmatmul.mubr.bf16.gmra.mxu0 %v1254
        %v1293 = vpop.f32.mrf.mxu0
        %v1294 = vadd.f32 0.0, %v1293
        %v1295 = vpop.f32.mrf.mxu0
        %v1296 = vpop.f32.mrf.mxu0
        %v1297 = vpop.f32.mrf.mxu0
        %1298 = vdwg.mxu0
        %1299 = vrot.lane.b32.xlu0 %v898, 64
        %v1300 = vpop.permute.xlu0 %1299
        %v1302 = vsel %vm1105, %v1153, 0
        %v1305 = vsel %vm1159, %v1300, 0
        %1307 = vmatprep.subr.bf16.mxu0 0
        %1308 = vmatpush1.bf16.msra.mxu0 0
        %1309 = vmatprep.subr.bf16.mxu0 0
        %1310 = vmatpush1.bf16.msra.mxu0 0
        %1311 = vmatprep.subr.bf16.mxu0 0
        %1312 = vmatpush1.bf16.msra.mxu0 0
        %1313 = vmatprep.subr.bf16.mxu0 0
        %1314 = vmatpush1.bf16.msra.mxu0 0
        %1315 = vmatprep.subr.bf16.mxu0 0
        %1316 = vmatpush1.bf16.msra.mxu0 0
        %1317 = vmatprep.subr.bf16.mxu0 0
        %1318 = vmatpush1.bf16.msra.mxu0 0
        %1319 = vmatprep.subr.bf16.mxu0 0
        %1320 = vmatpush1.bf16.msra.mxu0 0
        %1321 = vmatprep.subr.bf16.mxu0 0
        %1322 = vmatpush1.bf16.msra.mxu0 %v1305
        %1323 = vmatprep.subr.bf16.mxu0 0
        %1324 = vmatpush2.bf16.msra.mxu0 0
        %1325 = vmatprep.subr.bf16.mxu0 0
        %1326 = vmatpush2.bf16.msra.mxu0 0
        %1327 = vmatprep.subr.bf16.mxu0 0
        %1328 = vmatpush2.bf16.msra.mxu0 0
        %1329 = vmatprep.subr.bf16.mxu0 0
        %1330 = vmatpush2.bf16.msra.mxu0 0
        %1331 = vmatprep.subr.bf16.mxu0 0
        %1332 = vmatpush2.bf16.msra.mxu0 0
        %1333 = vmatprep.subr.bf16.mxu0 0
        %1334 = vmatpush2.bf16.msra.mxu0 0
        %1335 = vmatprep.subr.bf16.mxu0 0
        %1336 = vmatpush2.bf16.msra.mxu0 0
        %1337 = vmatprep.subr.bf16.mxu0 0
        %1338 = vmatpush2.bf16.msra.mxu0 0
        %1339 = vmatprep.mubr.bf16.mxu0 0
        %1340 = vmatmul.mubr.bf16.gmra.mxu0 %v1302
        %v1341 = vpop.f32.mrf.mxu0
        %v1342 = vadd.f32 0.0, %v1341
        %v1343 = vpop.f32.mrf.mxu0
        %v1344 = vpop.f32.mrf.mxu0
        %v1345 = vpop.f32.mrf.mxu0
        %1346 = vdwg.mxu0
        %v1347 = vpack.c.bf16 %v1198, %v1198
        %v1348 = vpack.c.bf16 %v1246, %v1246
        %v1349 = vpack.c.bf16 %v1294, %v1294
        %v1350 = vpack.c.bf16 %v1342, %v1342
        %v1351 = vld [vmem:[%s5] sm:$0xf]
        %v1352 = vld [vmem:[%s5 + $0x4] sm:$0xf]
        %v1353 = vld [vmem:[%s5 + $0x8] sm:$0xf]
        %v1354 = vld [vmem:[%s5 + $0xc] sm:$0xf]
        %v1355 = vld [vmem:[%s5 + $0x10] sm:$0xf]
        %v1356 = vld [vmem:[%s5 + $0x14] sm:$0xf]
        %v1357 = vld [vmem:[%s5 + $0x18] sm:$0xf]
        %v1358 = vld [vmem:[%s5 + $0x1c] sm:$0xf]
        %v1359 = vld [vmem:[%s5 + $0x20] sm:$0xf]
        %v1360 = vld [vmem:[%s5 + $0x24] sm:$0xf]
        %v1361 = vld [vmem:[%s5 + $0x28] sm:$0xf]
        %v1362 = vld [vmem:[%s5 + $0x2c] sm:$0xf]
        %v1363 = vld [vmem:[%s5 + $0x30] sm:$0xf]
        %v1364 = vld [vmem:[%s5 + $0x34] sm:$0xf]
        %v1365 = vld [vmem:[%s5 + $0x38] sm:$0xf]
        %v1366 = vld [vmem:[%s5 + $0x3c] sm:$0xf]
        %v1371 = vunpack.c.l.b16 %v1351
        %v1372 = vunpack.c.l.b16 %v1352
        %v1373 = vunpack.c.l.b16 %v1353
        %v1374 = vunpack.c.l.b16 %v1354
        %v1375 = vpack.c.b16 %v1372, %v1371
        %v1376 = vpack.c.b16 %v1374, %v1373
        %v1380 = vsel %vm902, %v1347, 0
        %1382 = vmatprep.subr.bf16.mxu0 0
        %1383 = vmatpush1.bf16.msra.mxu0 0
        %1384 = vmatprep.subr.bf16.mxu0 0
        %1385 = vmatpush1.bf16.msra.mxu0 0
        %1386 = vmatprep.subr.bf16.mxu0 0
        %1387 = vmatpush1.bf16.msra.mxu0 0
        %1388 = vmatprep.subr.bf16.mxu0 0
        %1389 = vmatpush1.bf16.msra.mxu0 0
        %1390 = vmatprep.subr.bf16.mxu0 0
        %1391 = vmatpush1.bf16.msra.mxu0 0
        %1392 = vmatprep.subr.bf16.mxu0 0
        %1393 = vmatpush1.bf16.msra.mxu0 0
        %1394 = vmatprep.subr.bf16.mxu0 0
        %1395 = vmatpush1.bf16.msra.mxu0 %v1376
        %1396 = vmatprep.subr.bf16.mxu0 0
        %1397 = vmatpush1.bf16.msra.mxu0 %v1375
        %1398 = vmatprep.subr.bf16.mxu0 0
        %1399 = vmatpush2.bf16.msra.mxu0 0
        %1400 = vmatprep.subr.bf16.mxu0 0
        %1401 = vmatpush2.bf16.msra.mxu0 0
        %1402 = vmatprep.subr.bf16.mxu0 0
        %1403 = vmatpush2.bf16.msra.mxu0 0
        %1404 = vmatprep.subr.bf16.mxu0 0
        %1405 = vmatpush2.bf16.msra.mxu0 0
        %1406 = vmatprep.subr.bf16.mxu0 0
        %1407 = vmatpush2.bf16.msra.mxu0 0
        %1408 = vmatprep.subr.bf16.mxu0 0
        %1409 = vmatpush2.bf16.msra.mxu0 0
        %1410 = vmatprep.subr.bf16.mxu0 0
        %1411 = vmatpush2.bf16.msra.mxu0 0
        %1412 = vmatprep.subr.bf16.mxu0 0
        %1413 = vmatpush2.bf16.msra.mxu0 0
        %1414 = vmatprep.mubr.bf16.mxu0 0
        %1415 = vmatmul.mubr.bf16.gmra.mxu0 %v1380
        %v1416 = vpop.f32.mrf.mxu0
        %v1417 = vadd.f32 0.0, %v1416
        %v1418 = vpop.f32.mrf.mxu0
        %v1419 = vpop.f32.mrf.mxu0
        %v1420 = vpop.f32.mrf.mxu0
        %1421 = vdwg.mxu0
        %v1426 = vunpack.c.l.b16 %v1355
        %v1427 = vunpack.c.l.b16 %v1356
        %v1428 = vunpack.c.l.b16 %v1357
        %v1429 = vunpack.c.l.b16 %v1358
        %v1430 = vpack.c.b16 %v1427, %v1426
        %v1431 = vpack.c.b16 %v1429, %v1428
        %v1435 = vsel %vm902, %v1348, 0
        %1437 = vmatprep.subr.bf16.mxu0 0
        %1438 = vmatpush1.bf16.msra.mxu0 0
        %1439 = vmatprep.subr.bf16.mxu0 0
        %1440 = vmatpush1.bf16.msra.mxu0 0
        %1441 = vmatprep.subr.bf16.mxu0 0
        %1442 = vmatpush1.bf16.msra.mxu0 0
        %1443 = vmatprep.subr.bf16.mxu0 0
        %1444 = vmatpush1.bf16.msra.mxu0 0
        %1445 = vmatprep.subr.bf16.mxu0 0
        %1446 = vmatpush1.bf16.msra.mxu0 0
        %1447 = vmatprep.subr.bf16.mxu0 0
        %1448 = vmatpush1.bf16.msra.mxu0 0
        %1449 = vmatprep.subr.bf16.mxu0 0
        %1450 = vmatpush1.bf16.msra.mxu0 %v1431
        %1451 = vmatprep.subr.bf16.mxu0 0
        %1452 = vmatpush1.bf16.msra.mxu0 %v1430
        %1453 = vmatprep.subr.bf16.mxu0 0
        %1454 = vmatpush2.bf16.msra.mxu0 0
        %1455 = vmatprep.subr.bf16.mxu0 0
        %1456 = vmatpush2.bf16.msra.mxu0 0
        %1457 = vmatprep.subr.bf16.mxu0 0
        %1458 = vmatpush2.bf16.msra.mxu0 0
        %1459 = vmatprep.subr.bf16.mxu0 0
        %1460 = vmatpush2.bf16.msra.mxu0 0
        %1461 = vmatprep.subr.bf16.mxu0 0
        %1462 = vmatpush2.bf16.msra.mxu0 0
        %1463 = vmatprep.subr.bf16.mxu0 0
        %1464 = vmatpush2.bf16.msra.mxu0 0
        %1465 = vmatprep.subr.bf16.mxu0 0
        %1466 = vmatpush2.bf16.msra.mxu0 0
        %1467 = vmatprep.subr.bf16.mxu0 0
        %1468 = vmatpush2.bf16.msra.mxu0 0
        %1469 = vmatprep.mubr.bf16.mxu0 0
        %1470 = vmatmul.mubr.bf16.gmra.mxu0 %v1435
        %v1471 = vpop.f32.mrf.mxu0
        %v1472 = vadd.f32 0.0, %v1471
        %v1473 = vpop.f32.mrf.mxu0
        %v1474 = vpop.f32.mrf.mxu0
        %v1475 = vpop.f32.mrf.mxu0
        %1476 = vdwg.mxu0
        %v1481 = vunpack.c.l.b16 %v1359
        %v1482 = vunpack.c.l.b16 %v1360
        %v1483 = vunpack.c.l.b16 %v1361
        %v1484 = vunpack.c.l.b16 %v1362
        %v1485 = vpack.c.b16 %v1482, %v1481
        %v1486 = vpack.c.b16 %v1484, %v1483
        %v1490 = vsel %vm902, %v1349, 0
        %1492 = vmatprep.subr.bf16.mxu0 0
        %1493 = vmatpush1.bf16.msra.mxu0 0
        %1494 = vmatprep.subr.bf16.mxu0 0
        %1495 = vmatpush1.bf16.msra.mxu0 0
        %1496 = vmatprep.subr.bf16.mxu0 0
        %1497 = vmatpush1.bf16.msra.mxu0 0
        %1498 = vmatprep.subr.bf16.mxu0 0
        %1499 = vmatpush1.bf16.msra.mxu0 0
        %1500 = vmatprep.subr.bf16.mxu0 0
        %1501 = vmatpush1.bf16.msra.mxu0 0
        %1502 = vmatprep.subr.bf16.mxu0 0
        %1503 = vmatpush1.bf16.msra.mxu0 0
        %1504 = vmatprep.subr.bf16.mxu0 0
        %1505 = vmatpush1.bf16.msra.mxu0 %v1486
        %1506 = vmatprep.subr.bf16.mxu0 0
        %1507 = vmatpush1.bf16.msra.mxu0 %v1485
        %1508 = vmatprep.subr.bf16.mxu0 0
        %1509 = vmatpush2.bf16.msra.mxu0 0
        %1510 = vmatprep.subr.bf16.mxu0 0
        %1511 = vmatpush2.bf16.msra.mxu0 0
        %1512 = vmatprep.subr.bf16.mxu0 0
        %1513 = vmatpush2.bf16.msra.mxu0 0
        %1514 = vmatprep.subr.bf16.mxu0 0
        %1515 = vmatpush2.bf16.msra.mxu0 0
        %1516 = vmatprep.subr.bf16.mxu0 0
        %1517 = vmatpush2.bf16.msra.mxu0 0
        %1518 = vmatprep.subr.bf16.mxu0 0
        %1519 = vmatpush2.bf16.msra.mxu0 0
        %1520 = vmatprep.subr.bf16.mxu0 0
        %1521 = vmatpush2.bf16.msra.mxu0 0
        %1522 = vmatprep.subr.bf16.mxu0 0
        %1523 = vmatpush2.bf16.msra.mxu0 0
        %1524 = vmatprep.mubr.bf16.mxu0 0
        %1525 = vmatmul.mubr.bf16.gmra.mxu0 %v1490
        %v1526 = vpop.f32.mrf.mxu0
        %v1527 = vadd.f32 0.0, %v1526
        %v1528 = vpop.f32.mrf.mxu0
        %v1529 = vpop.f32.mrf.mxu0
        %v1530 = vpop.f32.mrf.mxu0
        %1531 = vdwg.mxu0
        %v1536 = vunpack.c.l.b16 %v1363
        %v1537 = vunpack.c.l.b16 %v1364
        %v1538 = vunpack.c.l.b16 %v1365
        %v1539 = vunpack.c.l.b16 %v1366
        %v1540 = vpack.c.b16 %v1537, %v1536
        %v1541 = vpack.c.b16 %v1539, %v1538
        %v1545 = vsel %vm902, %v1350, 0
        %1547 = vmatprep.subr.bf16.mxu0 0
        %1548 = vmatpush1.bf16.msra.mxu0 0
        %1549 = vmatprep.subr.bf16.mxu0 0
        %1550 = vmatpush1.bf16.msra.mxu0 0
        %1551 = vmatprep.subr.bf16.mxu0 0
        %1552 = vmatpush1.bf16.msra.mxu0 0
        %1553 = vmatprep.subr.bf16.mxu0 0
        %1554 = vmatpush1.bf16.msra.mxu0 0
        %1555 = vmatprep.subr.bf16.mxu0 0
        %1556 = vmatpush1.bf16.msra.mxu0 0
        %1557 = vmatprep.subr.bf16.mxu0 0
        %1558 = vmatpush1.bf16.msra.mxu0 0
        %1559 = vmatprep.subr.bf16.mxu0 0
        %1560 = vmatpush1.bf16.msra.mxu0 %v1541
        %1561 = vmatprep.subr.bf16.mxu0 0
        %1562 = vmatpush1.bf16.msra.mxu0 %v1540
        %1563 = vmatprep.subr.bf16.mxu0 0
        %1564 = vmatpush2.bf16.msra.mxu0 0
        %1565 = vmatprep.subr.bf16.mxu0 0
        %1566 = vmatpush2.bf16.msra.mxu0 0
        %1567 = vmatprep.subr.bf16.mxu0 0
        %1568 = vmatpush2.bf16.msra.mxu0 0
        %1569 = vmatprep.subr.bf16.mxu0 0
        %1570 = vmatpush2.bf16.msra.mxu0 0
        %1571 = vmatprep.subr.bf16.mxu0 0
        %1572 = vmatpush2.bf16.msra.mxu0 0
        %1573 = vmatprep.subr.bf16.mxu0 0
        %1574 = vmatpush2.bf16.msra.mxu0 0
        %1575 = vmatprep.subr.bf16.mxu0 0
        %1576 = vmatpush2.bf16.msra.mxu0 0
        %1577 = vmatprep.subr.bf16.mxu0 0
        %1578 = vmatpush2.bf16.msra.mxu0 0
        %1579 = vmatprep.mubr.bf16.mxu0 0
        %1580 = vmatmul.mubr.bf16.gmra.mxu0 %v1545
        %v1581 = vpop.f32.mrf.mxu0
        %v1582 = vadd.f32 0.0, %v1581
        %v1583 = vpop.f32.mrf.mxu0
        %v1584 = vpop.f32.mrf.mxu0
        %v1585 = vpop.f32.mrf.mxu0
        %1586 = vdwg.mxu0
        %v1587 = vadd.f32 %v1417, %v1472
        %v1588 = vadd.f32 %v1587, %v1527
        %v1589 = vadd.f32 %v1588, %v1582
        %v1590 = vadd.f32 %v1589, %v410
        %v1591 = vld [vmem:[%s6] sm:$0x1]
        %v1592 = vld [vmem:[%s7] sm:$0x1]
        %1593 = vadd.xlane.f32.xlu0 %v1590
        %v1594 = vpop.xlane.xlu0 %1593
        %v1595 = vmul.f32 %v1594, 0.03125
        %v1596 = vsub.f32 %v1590, %v1595
        %v1597 = vsel %vm413, %v1596, 0.0
        %v1598 = vmul.f32 %v1597, %v1597
        %1599 = vadd.xlane.f32.xlu0 %v1598
        %v1600 = vpop.xlane.xlu0 %1599
        %v1601 = vmul.f32 %v1600, 0.03125
        %v1602 = vadd.f32 %v1601, 1e-05
        %v1603 = vrsqrt.pop %v1602
        %v1604 = vmul.f32 %v1597, %v1603
        %v1606 = vlaneseq
        %v1607 = vshrl.u32 %v1606, 7
        %v1608 = vsub.s32 0, %v1607
        %v1609 = vrot.slane %v1591, %v1608
        %v1611 = vmul.f32 %v1604, %v1609
        %v1613 = vlaneseq
        %v1614 = vshrl.u32 %v1613, 7
        %v1615 = vsub.s32 0, %v1614
        %v1616 = vrot.slane %v1592, %v1615
        %v1618 = vadd.f32 %v1611, %v1616
        %v1619 = vpack.c.bf16 %v1618, %v1618
        %v1620 = vld [vmem:[%s8] sm:$0xf]
        %v1621 = vld [vmem:[%s8 + $0x4] sm:$0xf]
        %v1622 = vld [vmem:[%s8 + $0x8] sm:$0xf]
        %v1623 = vld [vmem:[%s8 + $0xc] sm:$0xf]
        %v1624 = vld [vmem:[%s8 + $0x10] sm:$0xf]
        %v1625 = vld [vmem:[%s8 + $0x14] sm:$0xf]
        %v1626 = vld [vmem:[%s8 + $0x18] sm:$0xf]
        %v1627 = vld [vmem:[%s8 + $0x1c] sm:$0xf]
        %v1628 = vld [vmem:[%s8 + $0x20] sm:$0xf]
        %v1629 = vld [vmem:[%s8 + $0x24] sm:$0xf]
        %v1630 = vld [vmem:[%s8 + $0x28] sm:$0xf]
        %v1631 = vld [vmem:[%s8 + $0x2c] sm:$0xf]
        %v1632 = vld [vmem:[%s8 + $0x30] sm:$0xf]
        %v1633 = vld [vmem:[%s8 + $0x34] sm:$0xf]
        %v1634 = vld [vmem:[%s8 + $0x38] sm:$0xf]
        %v1635 = vld [vmem:[%s8 + $0x3c] sm:$0xf]
        %v1636 = vld [vmem:[%s9] sm:$0x1]
        %v1638 = vlaneseq
        %v1639 = vshrl.u32 %v1638, 7
        %v1640 = vsub.s32 0, %v1639
        %v1641 = vrot.slane %v1636, %v1640
        %v1659 = vunpack.c.l.b16 %v1620
        %v1660 = vunpack.c.l.b16 %v1621
        %v1661 = vunpack.c.l.b16 %v1622
        %v1662 = vunpack.c.l.b16 %v1623
        %v1663 = vunpack.c.l.b16 %v1624
        %v1664 = vunpack.c.l.b16 %v1625
        %v1665 = vunpack.c.l.b16 %v1626
        %v1666 = vunpack.c.l.b16 %v1627
        %v1667 = vunpack.c.l.b16 %v1628
        %v1668 = vunpack.c.l.b16 %v1629
        %v1669 = vunpack.c.l.b16 %v1630
        %v1670 = vunpack.c.l.b16 %v1631
        %v1671 = vunpack.c.l.b16 %v1632
        %v1672 = vunpack.c.l.b16 %v1633
        %v1673 = vunpack.c.l.b16 %v1634
        %v1674 = vunpack.c.l.b16 %v1635
        %v1675 = vpack.c.b16 %v1660, %v1659
        %v1676 = vpack.c.b16 %v1662, %v1661
        %v1677 = vpack.c.b16 %v1664, %v1663
        %v1678 = vpack.c.b16 %v1666, %v1665
        %v1679 = vpack.c.b16 %v1668, %v1667
        %v1680 = vpack.c.b16 %v1670, %v1669
        %v1681 = vpack.c.b16 %v1672, %v1671
        %v1682 = vpack.c.b16 %v1674, %v1673
        %1691 = vmatprep.subr.bf16.mxu0 0
        %1692 = vmatpush1.bf16.msra.mxu0 %v1682
        %1693 = vmatprep.subr.bf16.mxu0 0
        %1694 = vmatpush1.bf16.msra.mxu0 %v1681
        %1695 = vmatprep.subr.bf16.mxu0 0
        %1696 = vmatpush1.bf16.msra.mxu0 %v1680
        %1697 = vmatprep.subr.bf16.mxu0 0
        %1698 = vmatpush1.bf16.msra.mxu0 %v1679
        %1699 = vmatprep.subr.bf16.mxu0 0
        %1700 = vmatpush1.bf16.msra.mxu0 %v1678
        %1701 = vmatprep.subr.bf16.mxu0 0
        %1702 = vmatpush1.bf16.msra.mxu0 %v1677
        %1703 = vmatprep.subr.bf16.mxu0 0
        %1704 = vmatpush1.bf16.msra.mxu0 %v1676
        %1705 = vmatprep.subr.bf16.mxu0 0
        %1706 = vmatpush1.bf16.msra.mxu0 %v1675
        %1707 = vmatprep.subr.bf16.mxu0 0
        %1708 = vmatpush2.bf16.msra.mxu0 0
        %1709 = vmatprep.subr.bf16.mxu0 0
        %1710 = vmatpush2.bf16.msra.mxu0 0
        %1711 = vmatprep.subr.bf16.mxu0 0
        %1712 = vmatpush2.bf16.msra.mxu0 0
        %1713 = vmatprep.subr.bf16.mxu0 0
        %1714 = vmatpush2.bf16.msra.mxu0 0
        %1715 = vmatprep.subr.bf16.mxu0 0
        %1716 = vmatpush2.bf16.msra.mxu0 0
        %1717 = vmatprep.subr.bf16.mxu0 0
        %1718 = vmatpush2.bf16.msra.mxu0 0
        %1719 = vmatprep.subr.bf16.mxu0 0
        %1720 = vmatpush2.bf16.msra.mxu0 0
        %1721 = vmatprep.subr.bf16.mxu0 0
        %1722 = vmatpush2.bf16.msra.mxu0 0
        %1723 = vmatprep.mubr.bf16.mxu0 0
        %1724 = vmatmul.mubr.bf16.gmra.mxu0 %v1619
        %v1725 = vpop.f32.mrf.mxu0
        %v1726 = vadd.f32 %v1641, %v1725
        %v1727 = vpop.f32.mrf.mxu0
        %v1728 = vpop.f32.mrf.mxu0
        %v1729 = vpop.f32.mrf.mxu0
        %1730 = vdwg.mxu0
        %v1731 = vmax.f32 %v1726, 0.0
        %v1732 = vpack.c.bf16 %v1731, %v1731
        %v1733 = vld [vmem:[%s10] sm:$0xf]
        %v1734 = vld [vmem:[%s10 + $0x4] sm:$0xf]
        %v1735 = vld [vmem:[%s10 + $0x8] sm:$0xf]
        %v1736 = vld [vmem:[%s10 + $0xc] sm:$0xf]
        %v1737 = vld [vmem:[%s10 + $0x10] sm:$0xf]
        %v1738 = vld [vmem:[%s10 + $0x14] sm:$0xf]
        %v1739 = vld [vmem:[%s10 + $0x18] sm:$0xf]
        %v1740 = vld [vmem:[%s10 + $0x1c] sm:$0xf]
        %v1741 = vld [vmem:[%s10 + $0x20] sm:$0xf]
        %v1742 = vld [vmem:[%s10 + $0x24] sm:$0xf]
        %v1743 = vld [vmem:[%s10 + $0x28] sm:$0xf]
        %v1744 = vld [vmem:[%s10 + $0x2c] sm:$0xf]
        %v1745 = vld [vmem:[%s10 + $0x30] sm:$0xf]
        %v1746 = vld [vmem:[%s10 + $0x34] sm:$0xf]
        %v1747 = vld [vmem:[%s10 + $0x38] sm:$0xf]
        %v1748 = vld [vmem:[%s10 + $0x3c] sm:$0xf]
        %v1749 = vld [vmem:[%s11] sm:$0x1]
        %v1751 = vlaneseq
        %v1752 = vshrl.u32 %v1751, 7
        %v1753 = vsub.s32 0, %v1752
        %v1754 = vrot.slane %v1749, %v1753
        %v1772 = vunpack.c.l.b16 %v1733
        %v1773 = vunpack.c.l.b16 %v1734
        %v1774 = vunpack.c.l.b16 %v1735
        %v1775 = vunpack.c.l.b16 %v1736
        %v1776 = vunpack.c.l.b16 %v1737
        %v1777 = vunpack.c.l.b16 %v1738
        %v1778 = vunpack.c.l.b16 %v1739
        %v1779 = vunpack.c.l.b16 %v1740
        %v1780 = vunpack.c.l.b16 %v1741
        %v1781 = vunpack.c.l.b16 %v1742
        %v1782 = vunpack.c.l.b16 %v1743
        %v1783 = vunpack.c.l.b16 %v1744
        %v1784 = vunpack.c.l.b16 %v1745
        %v1785 = vunpack.c.l.b16 %v1746
        %v1786 = vunpack.c.l.b16 %v1747
        %v1787 = vunpack.c.l.b16 %v1748
        %v1788 = vpack.c.b16 %v1773, %v1772
        %v1789 = vpack.c.b16 %v1775, %v1774
        %v1790 = vpack.c.b16 %v1777, %v1776
        %v1791 = vpack.c.b16 %v1779, %v1778
        %v1792 = vpack.c.b16 %v1781, %v1780
        %v1793 = vpack.c.b16 %v1783, %v1782
        %v1794 = vpack.c.b16 %v1785, %v1784
        %v1795 = vpack.c.b16 %v1787, %v1786
        %1804 = vmatprep.subr.bf16.mxu0 0
        %1805 = vmatpush1.bf16.msra.mxu0 %v1795
        %1806 = vmatprep.subr.bf16.mxu0 0
        %1807 = vmatpush1.bf16.msra.mxu0 %v1794
        %1808 = vmatprep.subr.bf16.mxu0 0
        %1809 = vmatpush1.bf16.msra.mxu0 %v1793
        %1810 = vmatprep.subr.bf16.mxu0 0
        %1811 = vmatpush1.bf16.msra.mxu0 %v1792
        %1812 = vmatprep.subr.bf16.mxu0 0
        %1813 = vmatpush1.bf16.msra.mxu0 %v1791
        %1814 = vmatprep.subr.bf16.mxu0 0
        %1815 = vmatpush1.bf16.msra.mxu0 %v1790
        %1816 = vmatprep.subr.bf16.mxu0 0
        %1817 = vmatpush1.bf16.msra.mxu0 %v1789
        %1818 = vmatprep.subr.bf16.mxu0 0
        %1819 = vmatpush1.bf16.msra.mxu0 %v1788
        %1820 = vmatprep.subr.bf16.mxu0 0
        %1821 = vmatpush2.bf16.msra.mxu0 0
        %1822 = vmatprep.subr.bf16.mxu0 0
        %1823 = vmatpush2.bf16.msra.mxu0 0
        %1824 = vmatprep.subr.bf16.mxu0 0
        %1825 = vmatpush2.bf16.msra.mxu0 0
        %1826 = vmatprep.subr.bf16.mxu0 0
        %1827 = vmatpush2.bf16.msra.mxu0 0
        %1828 = vmatprep.subr.bf16.mxu0 0
        %1829 = vmatpush2.bf16.msra.mxu0 0
        %1830 = vmatprep.subr.bf16.mxu0 0
        %1831 = vmatpush2.bf16.msra.mxu0 0
        %1832 = vmatprep.subr.bf16.mxu0 0
        %1833 = vmatpush2.bf16.msra.mxu0 0
        %1834 = vmatprep.subr.bf16.mxu0 0
        %1835 = vmatpush2.bf16.msra.mxu0 0
        %1836 = vmatprep.mubr.bf16.mxu0 0
        %1837 = vmatmul.mubr.bf16.gmra.mxu0 %v1732
        %v1838 = vpop.f32.mrf.mxu0
        %v1839 = vadd.f32 %v1754, %v1838
        %v1840 = vpop.f32.mrf.mxu0
        %v1841 = vpop.f32.mrf.mxu0
        %v1842 = vpop.f32.mrf.mxu0
        %1843 = vdwg.mxu0
        %v1844 = vadd.f32 %v1839, %v410
        %1845 = vst [vmem:[%s404] sm:$0xff] %v1844
        %s1846 = sand.u32 %s291, 1
        %s1847 = scalar_lea.sflag [#allocation3], %s1846
        %s1848 = sand.u32 %s291, 1
        %s1849 = smul.addr %s1848, 8
        %s1850 = scalar_lea.vmem [#allocation2], %s1849
        // Predicated region
        $region69: #{tpu_custom_call.1} parent=67 // pred_check
          %p1851 = pneg %p301
        $region70: #{tpu_custom_call.1} parent=67 // pred_check_branch
          %1853 = sbr.rel (%p1851) target = $region72
        $region71: #{tpu_custom_call.1} parent=67 // pred_region
          %s1855 = ssub.s32 128, 128
          %1856 = vsyncadd %s1847, %s1855
          %s1857 = smul.addr %s26, 128
          %s1858 = scalar_lea.hbm %s12, %s1857
          %s1860 = sshll.u32 %s1850, 4
          %s1861 = int_to_ptr.vmem [resolvable:$true] %s1860
          %1863 = dma.vmem_to_hbm [thread:$0]  %s1861, 128, %s1858, %s1847
        $region72: #{tpu_custom_call.1} parent=67 // pred_fallthru
          _
      $region68: #{tpu_custom_call.1} parent=5 // pred_fallthru
        _
      %p1864 = scmp.le.s32.totalorder 2, %s21
      // Predicated region
      $region73: #{tpu_custom_call.1} parent=5 // pred_check
        %p1865 = pneg %p1864
      $region74: #{tpu_custom_call.1} parent=5 // pred_check_branch
        %1867 = sbr.rel (%p1865) target = $region76
      $region75: #{tpu_custom_call.1} parent=5 // pred_region
        %s1868 = ssub.s32 %s21, 2
        // Predicated region
        $region77: #{tpu_custom_call.1} parent=75 // pred_check
          %p1869 = pneg %p307
        $region78: #{tpu_custom_call.1} parent=75 // pred_check_branch
          %1871 = sbr.rel (%p1869) target = $region80
        $region79: #{tpu_custom_call.1} parent=75 // pred_region
          %s1872 = sand.u32 %s292, 1
          %s1873 = scalar_lea.sflag [#allocation3], %s1872
          %s1874 = sand.u32 %s292, 1
          %s1875 = smul.addr %s1874, 8
          %s1876 = scalar_lea.vmem [#allocation2], %s1875
          %1877 = dma.done %s1873, 128
        $region80: #{tpu_custom_call.1} parent=75 // pred_fallthru
          _
      $region76: #{tpu_custom_call.1} parent=5 // pred_fallthru
        _
    $region6: #{tpu_custom_call.1} parent=1 // loop_footer
      %s25 = sadd.s32 1, %s21
    $region7: #{tpu_custom_call.1} parent=1 // loop_footer_branch
      %20 = sbr.rel target = $region3
    $region8: #{tpu_custom_call.1} parent=1 // loop_exit
      _
    %1878 = vsyncpa [#allocation3], 1
    %s1879 = scalar_lea.sflag [#allocation3], 1
    %1880 = vsyncpa %s1879, 1

</llo_original>
